<compile_context>
chip_gen: v6e
topology: v6e:2x2x1
jax: 0.10.0
libtpu: 0.0.40
codegen_flags: <defaults>
</compile_context>

<pallas_src>
import functools

import jax
import jax.numpy as jnp
import numpy as np
from jax import lax
from jax.experimental import pallas as pl
from jax.experimental.pallas import tpu as pltpu


def _maxpool3d_kernel(x_ref, o_ref, hred_ref, *, k, s, p, out_h, out_w):
    # x_ref   : (D, H, W, L)          resident input slab for this lane block
    # o_ref   : (d_t, out_h*out_w, L) one output-D tile (flattened H,W)
    # hred_ref: (d_in_t, out_h*out_w, L) per-input-D-row W+H-reduced scratch
    D, H, W, L = x_ref.shape
    d_t = o_ref.shape[0]
    d_in_t = hred_ref.shape[0]
    dtype = o_ref.dtype
    Wp, Hp = W + 2 * p, H + 2 * p
    Wm, Hm = Wp - k + 1, Hp - k + 1          # stride-1 window-max positions

    j = pl.program_id(1)
    dsrc0 = j * (d_t * s) - p                # global input-D row of slab row 0

    def reduce_hw(x):
        # ---- W stage: -inf pad, running max over k contiguous shifts, then
        #      one stride-s subsample (width-1 static slices, no gathers) ----
        if p > 0:
            padw = jnp.full((H, p, L), -jnp.inf, dtype)
            x = jnp.concatenate([padw, x, padw], axis=1)           # (H, Wp, L)
        m = x[:, 0:Wm, :]
        for kw in range(1, k):
            m = jnp.maximum(m, x[:, kw:kw + Wm, :])
        if s == 1:
            wrow = m[:, 0:out_w, :]
        else:
            wrow = jnp.concatenate(
                [m[:, ow * s:ow * s + 1, :] for ow in range(out_w)], axis=1)
        # ---- H stage: pad + running max + subsample, all on the leading
        #      axis (pure vreg-plane selection, no sublane movement) --------
        if p > 0:
            padh = jnp.full((p, out_w, L), -jnp.inf, dtype)
            wrow = jnp.concatenate([padh, wrow, padh], axis=0)     # (Hp,out_w,L)
        mh = wrow[0:Hm]
        for kh in range(1, k):
            mh = jnp.maximum(mh, wrow[kh:kh + Hm])
        # stride-s subsample along H; concatenating the (out_w, L) planes
        # flattens (out_h, out_w) -> out_h*out_w so stores stay dense.
        return jnp.concatenate([mh[oh * s] for oh in range(out_h)], axis=0)

    def row_body(r, carry):
        g = dsrc0 + r                         # global input-D row for slab row r
        row = reduce_hw(x_ref[jnp.clip(g, 0, D - 1)])
        valid = jnp.logical_and(g >= 0, g < D)
        # Out-of-range D rows (only at the two boundary tiles when p > 0)
        # become -inf, exactly like F.pad(..., -inf) on the D axis.
        hred_ref[r] = jnp.where(valid, row, -jnp.inf).astype(dtype)
        return carry

    lax.fori_loop(0, d_in_t, row_body, 0)

    # ---- D stage: static-index max over k reduced rows per output row -----
    for t in range(d_t):
        acc = hred_ref[t * s]
        for kd in range(1, k):
            acc = jnp.maximum(acc, hred_ref[t * s + kd])
        o_ref[t] = acc


def max_pool3d_channels_last(x, kernel_size, stride=None, padding=0):
    """3D max pool with -inf padding on channels-last input (D, H, W, L)."""
    if stride is None:
        stride = kernel_size
    k, s, p = int(kernel_size), int(stride), int(padding)
    if not jnp.issubdtype(x.dtype, jnp.floating):
        raise NotImplementedError("only floating dtypes (need -inf padding)")
    D, H, W, L = x.shape
    out_d = (D + 2 * p - k) // s + 1
    out_h = (H + 2 * p - k) // s + 1
    out_w = (W + 2 * p - k) // s + 1
    assert out_d >= 1 and out_h >= 1 and out_w >= 1

    # Lane blocking: 128-wide tiles when L divides evenly, otherwise one block
    # equal to the full lane dim (legal; avoids 16x zero-lane inflation when
    # N*C is small at the cost of lane-masked stores).
    lane_blk = 128 if L % 128 == 0 else L
    g_l = L // lane_blk
    esize = jnp.dtype(x.dtype).itemsize

    # Output-D tile size from a VMEM budget (keeps v7x's 64 MiB happy).
    def est_bytes(d_t):
        d_in_t = (d_t - 1) * s + k
        in_b = 2 * D * H * W * lane_blk * esize            # double-buffered
        out_b = 2 * d_t * out_h * out_w * lane_blk * esize
        scr_b = d_in_t * out_h * out_w * lane_blk * esize
        tmp_b = 6 * H * (W + 2 * p) * lane_blk * esize      # in-loop temporaries
        return in_b + out_b + scr_b + tmp_b

    target = 24 * 2**20
    d_t = 1
    for cand in range(1, min(out_d, 16) + 1):
        if out_d % cand == 0 and est_bytes(cand) <= target:
            d_t = cand
    d_in_t = (d_t - 1) * s + k
    g_d = out_d // d_t

    est = est_bytes(d_t)
    vmem_limit = int(min(48 * 2**20, max(32 * 2**20, int(1.5 * est) + (4 << 20))))

    kernel = functools.partial(_maxpool3d_kernel, k=k, s=s, p=p,
                               out_h=out_h, out_w=out_w)

    y = pl.pallas_call(
        kernel,
        out_shape=jax.ShapeDtypeStruct((out_d, out_h * out_w, L), x.dtype),
        grid_spec=pltpu.PrefetchScalarGridSpec(
            num_scalar_prefetch=0,
            grid=(g_l, g_d),
            in_specs=[
                # Input slab for lane block i; independent of j, so it stays
                # resident across all out_d tiles of the same lane block.
                pl.BlockSpec((D, H, W, lane_blk), lambda i, j: (0, 0, 0, i)),
            ],
            out_specs=pl.BlockSpec((d_t, out_h * out_w, lane_blk),
                                   lambda i, j: (j, 0, i)),
            scratch_shapes=[
                pltpu.VMEM((d_in_t, out_h * out_w, lane_blk), x.dtype),
            ],
        ),
        compiler_params=pltpu.CompilerParams(
            # No cross-step scratch carry -> both axes are parallel-safe
            # (gives the 2nd v7x TensorCore work even when g_l == 1).
            dimension_semantics=("parallel", "parallel"),
            vmem_limit_bytes=vmem_limit,
        ),
        cost_estimate=pl.CostEstimate(
            flops=3 * max(k - 1, 1) * out_d * out_h * out_w * L,
            transcendentals=0,
            bytes_accessed=(D * H * W * L + out_d * out_h * out_w * L) * esize,
        ),
    )(x)
    return y.reshape(out_d, out_h, out_w, L)


def deterministic_max_pool3d(x, kernel_size, stride=None, padding=0):
    """Pallas TPU equivalent of DeterministicMaxPool3d.forward. x is NCDHW."""
    N, C, D, H, W = x.shape
    # Layout glue only (a channels-last pipeline can call
    # max_pool3d_channels_last directly and skip both transposes).
    x_cl = jnp.transpose(x, (2, 3, 4, 0, 1)).reshape(D, H, W, N * C)
    y_cl = max_pool3d_channels_last(x_cl, kernel_size, stride, padding)
    out_d, out_h, out_w = y_cl.shape[:3]
    return jnp.transpose(y_cl.reshape(out_d, out_h, out_w, N, C),
                         (3, 4, 0, 1, 2))


if __name__ == "__main__":
    key = jax.random.PRNGKey(0)
    pool = jax.jit(deterministic_max_pool3d, static_argnums=(1, 2, 3))

    def reference(x, k, s, p):
        return lax.reduce_window(
            x, jnp.array(-jnp.inf, dtype=x.dtype), lax.max,
            window_dimensions=(1, 1, k, k, k),
            window_strides=(1, 1, s, s, s),
            padding=((0, 0), (0, 0), (p, p), (p, p), (p, p)))

    def check(shape, k, s, p, dt):
        x = jax.random.normal(key, shape, dtype=jnp.float32).astype(dt)
        y = jax.block_until_ready(pool(x, k, s, p))
        ref = reference(x, k, s, p)
        assert y.shape == ref.shape, (y.shape, ref.shape)
        np.testing.assert_array_equal(np.asarray(y, dtype=np.float32),
                                      np.asarray(ref, dtype=np.float32))

    # Base module-like shapes (batch=2, channels=4, spatial=16).
    for (k, s, p) in [(3, 2, 1), (2, 2, 0)]:
        for dt in (jnp.float32, jnp.bfloat16):
            check((2, 4, 16, 16, 16), k, s, p, dt)
    # Larger D so the output-D grid axis (j > 0 tiles, boundary -inf rows)
    # is actually exercised.
    check((1, 8, 40, 16, 16), 3, 2, 1, jnp.float32)
    # N*C multiple of 128 so the 128-lane blocking path (g_l > 1) is exercised.
    check((4, 64, 8, 8, 8), 2, 2, 0, jnp.float32)

    print("KERNEL_OK")
</pallas_src>

<mosaic_0001>
module attributes {stable_mosaic.version = 11 : i64} {
  func.func @_maxpool3d_kernel(%arg0: i32, %arg1: i32, %arg2: memref<16x16x16x8xf32, #tpu.memory_space<vmem>>, %arg3: memref<8x64x8xf32, #tpu.memory_space<vmem>>, %arg4: memref<17x64x8xf32, #tpu.memory_space<vmem>>) attributes {dimension_semantics = [#tpu.dimension_semantics<parallel>, #tpu.dimension_semantics<parallel>], iteration_bounds = array<i64: 1, 1>, scalar_prefetch = 0 : i64, scratch_operands = 1 : i64, tpu.core_type = #tpu.core_type<tc>, window_params = [{transform_indices = @transform_0, window_bounds = array<i64: 16, 16, 16, 8>}, {transform_indices = @transform_1, window_bounds = array<i64: 8, 64, 8>}]} {
    %c16_i32 = arith.constant 16 : i32
    %0 = arith.muli %arg1, %c16_i32 : i32
    %c1_i32 = arith.constant 1 : i32
    %1 = arith.subi %0, %c1_i32 : i32
    %c0_i32 = arith.constant 0 : i32
    %c17_i32 = arith.constant 17 : i32
    %2 = arith.addi %c0_i32, %c17_i32 : i32
    %c1_i32_0 = arith.constant 1 : i32
    scf.for %arg5 = %c0_i32 to %2 step %c1_i32_0  : i32 {
      %91 = arith.addi %1, %arg5 : i32
      %c0_i32_81 = arith.constant 0 : i32
      %c15_i32 = arith.constant 15 : i32
      %92 = arith.maxsi %c0_i32_81, %91 : i32
      %93 = arith.minsi %c15_i32, %92 : i32
      %94 = arith.index_cast %93 : i32 to index
      %c0_82 = arith.constant 0 : index
      %c0_83 = arith.constant 0 : index
      %c0_84 = arith.constant 0 : index
      %95 = vector.load %arg2[%94, %c0_82, %c0_83, %c0_84] : memref<16x16x16x8xf32, #tpu.memory_space<vmem>>, vector<1x16x16x8xf32>
      %96 = vector.shape_cast %95 : vector<1x16x16x8xf32> to vector<16x16x8xf32>
      %cst = arith.constant 0xFF800000 : f32
      %97 = vector.broadcast %cst : f32 to vector<16x1x8xf32>
      %98 = tpu.concatenate %97, %96, %97 in 1 : vector<16x1x8xf32>, vector<16x16x8xf32>, vector<16x1x8xf32> -> vector<16x18x8xf32>
      %99 = vector.extract_strided_slice %98 {offsets = [0, 0, 0], sizes = [16, 16, 8], strides = [1, 1, 1]} : vector<16x18x8xf32> to vector<16x16x8xf32>
      %100 = vector.extract_strided_slice %98 {offsets = [0, 1, 0], sizes = [16, 16, 8], strides = [1, 1, 1]} : vector<16x18x8xf32> to vector<16x16x8xf32>
      %101 = arith.maximumf %99, %100 : vector<16x16x8xf32>
      %102 = vector.extract_strided_slice %98 {offsets = [0, 2, 0], sizes = [16, 16, 8], strides = [1, 1, 1]} : vector<16x18x8xf32> to vector<16x16x8xf32>
      %103 = arith.maximumf %101, %102 : vector<16x16x8xf32>
      %104 = vector.extract_strided_slice %103 {offsets = [0, 0, 0], sizes = [16, 1, 8], strides = [1, 1, 1]} : vector<16x16x8xf32> to vector<16x1x8xf32>
      %105 = vector.extract_strided_slice %103 {offsets = [0, 2, 0], sizes = [16, 1, 8], strides = [1, 1, 1]} : vector<16x16x8xf32> to vector<16x1x8xf32>
      %106 = vector.extract_strided_slice %103 {offsets = [0, 4, 0], sizes = [16, 1, 8], strides = [1, 1, 1]} : vector<16x16x8xf32> to vector<16x1x8xf32>
      %107 = vector.extract_strided_slice %103 {offsets = [0, 6, 0], sizes = [16, 1, 8], strides = [1, 1, 1]} : vector<16x16x8xf32> to vector<16x1x8xf32>
      %108 = vector.extract_strided_slice %103 {offsets = [0, 8, 0], sizes = [16, 1, 8], strides = [1, 1, 1]} : vector<16x16x8xf32> to vector<16x1x8xf32>
      %109 = vector.extract_strided_slice %103 {offsets = [0, 10, 0], sizes = [16, 1, 8], strides = [1, 1, 1]} : vector<16x16x8xf32> to vector<16x1x8xf32>
      %110 = vector.extract_strided_slice %103 {offsets = [0, 12, 0], sizes = [16, 1, 8], strides = [1, 1, 1]} : vector<16x16x8xf32> to vector<16x1x8xf32>
      %111 = vector.extract_strided_slice %103 {offsets = [0, 14, 0], sizes = [16, 1, 8], strides = [1, 1, 1]} : vector<16x16x8xf32> to vector<16x1x8xf32>
      %112 = tpu.concatenate %104, %105, %106, %107, %108, %109, %110, %111 in 1 : vector<16x1x8xf32>, vector<16x1x8xf32>, vector<16x1x8xf32>, vector<16x1x8xf32>, vector<16x1x8xf32>, vector<16x1x8xf32>, vector<16x1x8xf32>, vector<16x1x8xf32> -> vector<16x8x8xf32>
      %cst_85 = arith.constant 0xFF800000 : f32
      %113 = vector.broadcast %cst_85 : f32 to vector<1x8x8xf32>
      %114 = tpu.concatenate %113, %112, %113 in 0 : vector<1x8x8xf32>, vector<16x8x8xf32>, vector<1x8x8xf32> -> vector<18x8x8xf32>
      %115 = vector.extract_strided_slice %114 {offsets = [0, 0, 0], sizes = [16, 8, 8], strides = [1, 1, 1]} : vector<18x8x8xf32> to vector<16x8x8xf32>
      %116 = vector.extract_strided_slice %114 {offsets = [1, 0, 0], sizes = [16, 8, 8], strides = [1, 1, 1]} : vector<18x8x8xf32> to vector<16x8x8xf32>
      %117 = arith.maximumf %115, %116 : vector<16x8x8xf32>
      %118 = vector.extract_strided_slice %114 {offsets = [2, 0, 0], sizes = [16, 8, 8], strides = [1, 1, 1]} : vector<18x8x8xf32> to vector<16x8x8xf32>
      %119 = arith.maximumf %117, %118 : vector<16x8x8xf32>
      %120 = vector.extract_strided_slice %119 {offsets = [0, 0, 0], sizes = [1, 8, 8], strides = [1, 1, 1]} : vector<16x8x8xf32> to vector<1x8x8xf32>
      %121 = vector.shape_cast %120 : vector<1x8x8xf32> to vector<8x8xf32>
      %122 = vector.extract_strided_slice %119 {offsets = [2, 0, 0], sizes = [1, 8, 8], strides = [1, 1, 1]} : vector<16x8x8xf32> to vector<1x8x8xf32>
      %123 = vector.shape_cast %122 : vector<1x8x8xf32> to vector<8x8xf32>
      %124 = vector.extract_strided_slice %119 {offsets = [4, 0, 0], sizes = [1, 8, 8], strides = [1, 1, 1]} : vector<16x8x8xf32> to vector<1x8x8xf32>
      %125 = vector.shape_cast %124 : vector<1x8x8xf32> to vector<8x8xf32>
      %126 = vector.extract_strided_slice %119 {offsets = [6, 0, 0], sizes = [1, 8, 8], strides = [1, 1, 1]} : vector<16x8x8xf32> to vector<1x8x8xf32>
      %127 = vector.shape_cast %126 : vector<1x8x8xf32> to vector<8x8xf32>
      %128 = vector.extract_strided_slice %119 {offsets = [8, 0, 0], sizes = [1, 8, 8], strides = [1, 1, 1]} : vector<16x8x8xf32> to vector<1x8x8xf32>
      %129 = vector.shape_cast %128 : vector<1x8x8xf32> to vector<8x8xf32>
      %130 = vector.extract_strided_slice %119 {offsets = [10, 0, 0], sizes = [1, 8, 8], strides = [1, 1, 1]} : vector<16x8x8xf32> to vector<1x8x8xf32>
      %131 = vector.shape_cast %130 : vector<1x8x8xf32> to vector<8x8xf32>
      %132 = vector.extract_strided_slice %119 {offsets = [12, 0, 0], sizes = [1, 8, 8], strides = [1, 1, 1]} : vector<16x8x8xf32> to vector<1x8x8xf32>
      %133 = vector.shape_cast %132 : vector<1x8x8xf32> to vector<8x8xf32>
      %134 = vector.extract_strided_slice %119 {offsets = [14, 0, 0], sizes = [1, 8, 8], strides = [1, 1, 1]} : vector<16x8x8xf32> to vector<1x8x8xf32>
      %135 = vector.shape_cast %134 : vector<1x8x8xf32> to vector<8x8xf32>
      %136 = tpu.concatenate %121, %123, %125, %127, %129, %131, %133, %135 in 0 : vector<8x8xf32>, vector<8x8xf32>, vector<8x8xf32>, vector<8x8xf32>, vector<8x8xf32>, vector<8x8xf32>, vector<8x8xf32>, vector<8x8xf32> -> vector<64x8xf32>
      %c0_i32_86 = arith.constant 0 : i32
      %137 = arith.cmpi sge, %91, %c0_i32_86 : i32
      %c16_i32_87 = arith.constant 16 : i32
      %138 = arith.cmpi slt, %91, %c16_i32_87 : i32
      %139 = arith.andi %137, %138 : i1
      %cst_88 = arith.constant 0xFF800000 : f32
      %140 = vector.broadcast %cst_88 : f32 to vector<64x8xf32>
      %141 = arith.select %139, %136, %140 : vector<64x8xf32>
      %142 = arith.index_cast %arg5 : i32 to index
      %c0_89 = arith.constant 0 : index
      %c0_90 = arith.constant 0 : index
      %143 = vector.load %arg4[%142, %c0_89, %c0_90] : memref<17x64x8xf32, #tpu.memory_space<vmem>>, vector<1x64x8xf32>
      %144 = vector.shape_cast %143 : vector<1x64x8xf32> to vector<64x8xf32>
      %145 = vector.shape_cast %141 : vector<64x8xf32> to vector<1x64x8xf32>
      tpu.vector_store %arg4[%142, %c0_89, %c0_90], %145 {strides = array<i32>} : memref<17x64x8xf32, #tpu.memory_space<vmem>>, vector<1x64x8xf32>,
    }
    %c17_i32_1 = arith.constant 17 : i32
    %c0 = arith.constant 0 : index
    %c0_2 = arith.constant 0 : index
    %c0_3 = arith.constant 0 : index
    %3 = vector.load %arg4[%c0, %c0_2, %c0_3] : memref<17x64x8xf32, #tpu.memory_space<vmem>>, vector<1x64x8xf32>
    %4 = vector.shape_cast %3 : vector<1x64x8xf32> to vector<64x8xf32>
    %c1 = arith.constant 1 : index
    %c0_4 = arith.constant 0 : index
    %c0_5 = arith.constant 0 : index
    %5 = vector.load %arg4[%c1, %c0_4, %c0_5] : memref<17x64x8xf32, #tpu.memory_space<vmem>>, vector<1x64x8xf32>
    %6 = vector.shape_cast %5 : vector<1x64x8xf32> to vector<64x8xf32>
    %7 = arith.maximumf %4, %6 : vector<64x8xf32>
    %c2 = arith.constant 2 : index
    %c0_6 = arith.constant 0 : index
    %c0_7 = arith.constant 0 : index
    %8 = vector.load %arg4[%c2, %c0_6, %c0_7] : memref<17x64x8xf32, #tpu.memory_space<vmem>>, vector<1x64x8xf32>
    %9 = vector.shape_cast %8 : vector<1x64x8xf32> to vector<64x8xf32>
    %10 = arith.maximumf %7, %9 : vector<64x8xf32>
    %c0_8 = arith.constant 0 : index
    %c0_9 = arith.constant 0 : index
    %c0_10 = arith.constant 0 : index
    %11 = vector.load %arg3[%c0_8, %c0_9, %c0_10] : memref<8x64x8xf32, #tpu.memory_space<vmem>>, vector<1x64x8xf32>
    %12 = vector.shape_cast %11 : vector<1x64x8xf32> to vector<64x8xf32>
    %13 = vector.shape_cast %10 : vector<64x8xf32> to vector<1x64x8xf32>
    tpu.vector_store %arg3[%c0_8, %c0_9, %c0_10], %13 {strides = array<i32>} : memref<8x64x8xf32, #tpu.memory_space<vmem>>, vector<1x64x8xf32>,
    %c2_11 = arith.constant 2 : index
    %c0_12 = arith.constant 0 : index
    %c0_13 = arith.constant 0 : index
    %14 = vector.load %arg4[%c2_11, %c0_12, %c0_13] : memref<17x64x8xf32, #tpu.memory_space<vmem>>, vector<1x64x8xf32>
    %15 = vector.shape_cast %14 : vector<1x64x8xf32> to vector<64x8xf32>
    %c3 = arith.constant 3 : index
    %c0_14 = arith.constant 0 : index
    %c0_15 = arith.constant 0 : index
    %16 = vector.load %arg4[%c3, %c0_14, %c0_15] : memref<17x64x8xf32, #tpu.memory_space<vmem>>, vector<1x64x8xf32>
    %17 = vector.shape_cast %16 : vector<1x64x8xf32> to vector<64x8xf32>
    %18 = arith.maximumf %15, %17 : vector<64x8xf32>
    %c4 = arith.constant 4 : index
    %c0_16 = arith.constant 0 : index
    %c0_17 = arith.constant 0 : index
    %19 = vector.load %arg4[%c4, %c0_16, %c0_17] : memref<17x64x8xf32, #tpu.memory_space<vmem>>, vector<1x64x8xf32>
    %20 = vector.shape_cast %19 : vector<1x64x8xf32> to vector<64x8xf32>
    %21 = arith.maximumf %18, %20 : vector<64x8xf32>
    %c1_18 = arith.constant 1 : index
    %c0_19 = arith.constant 0 : index
    %c0_20 = arith.constant 0 : index
    %22 = vector.load %arg3[%c1_18, %c0_19, %c0_20] : memref<8x64x8xf32, #tpu.memory_space<vmem>>, vector<1x64x8xf32>
    %23 = vector.shape_cast %22 : vector<1x64x8xf32> to vector<64x8xf32>
    %24 = vector.shape_cast %21 : vector<64x8xf32> to vector<1x64x8xf32>
    tpu.vector_store %arg3[%c1_18, %c0_19, %c0_20], %24 {strides = array<i32>} : memref<8x64x8xf32, #tpu.memory_space<vmem>>, vector<1x64x8xf32>,
    %c4_21 = arith.constant 4 : index
    %c0_22 = arith.constant 0 : index
    %c0_23 = arith.constant 0 : index
    %25 = vector.load %arg4[%c4_21, %c0_22, %c0_23] : memref<17x64x8xf32, #tpu.memory_space<vmem>>, vector<1x64x8xf32>
    %26 = vector.shape_cast %25 : vector<1x64x8xf32> to vector<64x8xf32>
    %c5 = arith.constant 5 : index
    %c0_24 = arith.constant 0 : index
    %c0_25 = arith.constant 0 : index
    %27 = vector.load %arg4[%c5, %c0_24, %c0_25] : memref<17x64x8xf32, #tpu.memory_space<vmem>>, vector<1x64x8xf32>
    %28 = vector.shape_cast %27 : vector<1x64x8xf32> to vector<64x8xf32>
    %29 = arith.maximumf %26, %28 : vector<64x8xf32>
    %c6 = arith.constant 6 : index
    %c0_26 = arith.constant 0 : index
    %c0_27 = arith.constant 0 : index
    %30 = vector.load %arg4[%c6, %c0_26, %c0_27] : memref<17x64x8xf32, #tpu.memory_space<vmem>>, vector<1x64x8xf32>
    %31 = vector.shape_cast %30 : vector<1x64x8xf32> to vector<64x8xf32>
    %32 = arith.maximumf %29, %31 : vector<64x8xf32>
    %c2_28 = arith.constant 2 : index
    %c0_29 = arith.constant 0 : index
    %c0_30 = arith.constant 0 : index
    %33 = vector.load %arg3[%c2_28, %c0_29, %c0_30] : memref<8x64x8xf32, #tpu.memory_space<vmem>>, vector<1x64x8xf32>
    %34 = vector.shape_cast %33 : vector<1x64x8xf32> to vector<64x8xf32>
    %35 = vector.shape_cast %32 : vector<64x8xf32> to vector<1x64x8xf32>
    tpu.vector_store %arg3[%c2_28, %c0_29, %c0_30], %35 {strides = array<i32>} : memref<8x64x8xf32, #tpu.memory_space<vmem>>, vector<1x64x8xf32>,
    %c6_31 = arith.constant 6 : index
    %c0_32 = arith.constant 0 : index
    %c0_33 = arith.constant 0 : index
    %36 = vector.load %arg4[%c6_31, %c0_32, %c0_33] : memref<17x64x8xf32, #tpu.memory_space<vmem>>, vector<1x64x8xf32>
    %37 = vector.shape_cast %36 : vector<1x64x8xf32> to vector<64x8xf32>
    %c7 = arith.constant 7 : index
    %c0_34 = arith.constant 0 : index
    %c0_35 = arith.constant 0 : index
    %38 = vector.load %arg4[%c7, %c0_34, %c0_35] : memref<17x64x8xf32, #tpu.memory_space<vmem>>, vector<1x64x8xf32>
    %39 = vector.shape_cast %38 : vector<1x64x8xf32> to vector<64x8xf32>
    %40 = arith.maximumf %37, %39 : vector<64x8xf32>
    %c8 = arith.constant 8 : index
    %c0_36 = arith.constant 0 : index
    %c0_37 = arith.constant 0 : index
    %41 = vector.load %arg4[%c8, %c0_36, %c0_37] : memref<17x64x8xf32, #tpu.memory_space<vmem>>, vector<1x64x8xf32>
    %42 = vector.shape_cast %41 : vector<1x64x8xf32> to vector<64x8xf32>
    %43 = arith.maximumf %40, %42 : vector<64x8xf32>
    %c3_38 = arith.constant 3 : index
    %c0_39 = arith.constant 0 : index
    %c0_40 = arith.constant 0 : index
    %44 = vector.load %arg3[%c3_38, %c0_39, %c0_40] : memref<8x64x8xf32, #tpu.memory_space<vmem>>, vector<1x64x8xf32>
    %45 = vector.shape_cast %44 : vector<1x64x8xf32> to vector<64x8xf32>
    %46 = vector.shape_cast %43 : vector<64x8xf32> to vector<1x64x8xf32>
    tpu.vector_store %arg3[%c3_38, %c0_39, %c0_40], %46 {strides = array<i32>} : memref<8x64x8xf32, #tpu.memory_space<vmem>>, vector<1x64x8xf32>,
    %c8_41 = arith.constant 8 : index
    %c0_42 = arith.constant 0 : index
    %c0_43 = arith.constant 0 : index
    %47 = vector.load %arg4[%c8_41, %c0_42, %c0_43] : memref<17x64x8xf32, #tpu.memory_space<vmem>>, vector<1x64x8xf32>
    %48 = vector.shape_cast %47 : vector<1x64x8xf32> to vector<64x8xf32>
    %c9 = arith.constant 9 : index
    %c0_44 = arith.constant 0 : index
    %c0_45 = arith.constant 0 : index
    %49 = vector.load %arg4[%c9, %c0_44, %c0_45] : memref<17x64x8xf32, #tpu.memory_space<vmem>>, vector<1x64x8xf32>
    %50 = vector.shape_cast %49 : vector<1x64x8xf32> to vector<64x8xf32>
    %51 = arith.maximumf %48, %50 : vector<64x8xf32>
    %c10 = arith.constant 10 : index
    %c0_46 = arith.constant 0 : index
    %c0_47 = arith.constant 0 : index
    %52 = vector.load %arg4[%c10, %c0_46, %c0_47] : memref<17x64x8xf32, #tpu.memory_space<vmem>>, vector<1x64x8xf32>
    %53 = vector.shape_cast %52 : vector<1x64x8xf32> to vector<64x8xf32>
    %54 = arith.maximumf %51, %53 : vector<64x8xf32>
    %c4_48 = arith.constant 4 : index
    %c0_49 = arith.constant 0 : index
    %c0_50 = arith.constant 0 : index
    %55 = vector.load %arg3[%c4_48, %c0_49, %c0_50] : memref<8x64x8xf32, #tpu.memory_space<vmem>>, vector<1x64x8xf32>
    %56 = vector.shape_cast %55 : vector<1x64x8xf32> to vector<64x8xf32>
    %57 = vector.shape_cast %54 : vector<64x8xf32> to vector<1x64x8xf32>
    tpu.vector_store %arg3[%c4_48, %c0_49, %c0_50], %57 {strides = array<i32>} : memref<8x64x8xf32, #tpu.memory_space<vmem>>, vector<1x64x8xf32>,
    %c10_51 = arith.constant 10 : index
    %c0_52 = arith.constant 0 : index
    %c0_53 = arith.constant 0 : index
    %58 = vector.load %arg4[%c10_51, %c0_52, %c0_53] : memref<17x64x8xf32, #tpu.memory_space<vmem>>, vector<1x64x8xf32>
    %59 = vector.shape_cast %58 : vector<1x64x8xf32> to vector<64x8xf32>
    %c11 = arith.constant 11 : index
    %c0_54 = arith.constant 0 : index
    %c0_55 = arith.constant 0 : index
    %60 = vector.load %arg4[%c11, %c0_54, %c0_55] : memref<17x64x8xf32, #tpu.memory_space<vmem>>, vector<1x64x8xf32>
    %61 = vector.shape_cast %60 : vector<1x64x8xf32> to vector<64x8xf32>
    %62 = arith.maximumf %59, %61 : vector<64x8xf32>
    %c12 = arith.constant 12 : index
    %c0_56 = arith.constant 0 : index
    %c0_57 = arith.constant 0 : index
    %63 = vector.load %arg4[%c12, %c0_56, %c0_57] : memref<17x64x8xf32, #tpu.memory_space<vmem>>, vector<1x64x8xf32>
    %64 = vector.shape_cast %63 : vector<1x64x8xf32> to vector<64x8xf32>
    %65 = arith.maximumf %62, %64 : vector<64x8xf32>
    %c5_58 = arith.constant 5 : index
    %c0_59 = arith.constant 0 : index
    %c0_60 = arith.constant 0 : index
    %66 = vector.load %arg3[%c5_58, %c0_59, %c0_60] : memref<8x64x8xf32, #tpu.memory_space<vmem>>, vector<1x64x8xf32>
    %67 = vector.shape_cast %66 : vector<1x64x8xf32> to vector<64x8xf32>
    %68 = vector.shape_cast %65 : vector<64x8xf32> to vector<1x64x8xf32>
    tpu.vector_store %arg3[%c5_58, %c0_59, %c0_60], %68 {strides = array<i32>} : memref<8x64x8xf32, #tpu.memory_space<vmem>>, vector<1x64x8xf32>,
    %c12_61 = arith.constant 12 : index
    %c0_62 = arith.constant 0 : index
    %c0_63 = arith.constant 0 : index
    %69 = vector.load %arg4[%c12_61, %c0_62, %c0_63] : memref<17x64x8xf32, #tpu.memory_space<vmem>>, vector<1x64x8xf32>
    %70 = vector.shape_cast %69 : vector<1x64x8xf32> to vector<64x8xf32>
    %c13 = arith.constant 13 : index
    %c0_64 = arith.constant 0 : index
    %c0_65 = arith.constant 0 : index
    %71 = vector.load %arg4[%c13, %c0_64, %c0_65] : memref<17x64x8xf32, #tpu.memory_space<vmem>>, vector<1x64x8xf32>
    %72 = vector.shape_cast %71 : vector<1x64x8xf32> to vector<64x8xf32>
    %73 = arith.maximumf %70, %72 : vector<64x8xf32>
    %c14 = arith.constant 14 : index
    %c0_66 = arith.constant 0 : index
    %c0_67 = arith.constant 0 : index
    %74 = vector.load %arg4[%c14, %c0_66, %c0_67] : memref<17x64x8xf32, #tpu.memory_space<vmem>>, vector<1x64x8xf32>
    %75 = vector.shape_cast %74 : vector<1x64x8xf32> to vector<64x8xf32>
    %76 = arith.maximumf %73, %75 : vector<64x8xf32>
    %c6_68 = arith.constant 6 : index
    %c0_69 = arith.constant 0 : index
    %c0_70 = arith.constant 0 : index
    %77 = vector.load %arg3[%c6_68, %c0_69, %c0_70] : memref<8x64x8xf32, #tpu.memory_space<vmem>>, vector<1x64x8xf32>
    %78 = vector.shape_cast %77 : vector<1x64x8xf32> to vector<64x8xf32>
    %79 = vector.shape_cast %76 : vector<64x8xf32> to vector<1x64x8xf32>
    tpu.vector_store %arg3[%c6_68, %c0_69, %c0_70], %79 {strides = array<i32>} : memref<8x64x8xf32, #tpu.memory_space<vmem>>, vector<1x64x8xf32>,
    %c14_71 = arith.constant 14 : index
    %c0_72 = arith.constant 0 : index
    %c0_73 = arith.constant 0 : index
    %80 = vector.load %arg4[%c14_71, %c0_72, %c0_73] : memref<17x64x8xf32, #tpu.memory_space<vmem>>, vector<1x64x8xf32>
    %81 = vector.shape_cast %80 : vector<1x64x8xf32> to vector<64x8xf32>
    %c15 = arith.constant 15 : index
    %c0_74 = arith.constant 0 : index
    %c0_75 = arith.constant 0 : index
    %82 = vector.load %arg4[%c15, %c0_74, %c0_75] : memref<17x64x8xf32, #tpu.memory_space<vmem>>, vector<1x64x8xf32>
    %83 = vector.shape_cast %82 : vector<1x64x8xf32> to vector<64x8xf32>
    %84 = arith.maximumf %81, %83 : vector<64x8xf32>
    %c16 = arith.constant 16 : index
    %c0_76 = arith.constant 0 : index
    %c0_77 = arith.constant 0 : index
    %85 = vector.load %arg4[%c16, %c0_76, %c0_77] : memref<17x64x8xf32, #tpu.memory_space<vmem>>, vector<1x64x8xf32>
    %86 = vector.shape_cast %85 : vector<1x64x8xf32> to vector<64x8xf32>
    %87 = arith.maximumf %84, %86 : vector<64x8xf32>
    %c7_78 = arith.constant 7 : index
    %c0_79 = arith.constant 0 : index
    %c0_80 = arith.constant 0 : index
    %88 = vector.load %arg3[%c7_78, %c0_79, %c0_80] : memref<8x64x8xf32, #tpu.memory_space<vmem>>, vector<1x64x8xf32>
    %89 = vector.shape_cast %88 : vector<1x64x8xf32> to vector<64x8xf32>
    %90 = vector.shape_cast %87 : vector<64x8xf32> to vector<1x64x8xf32>
    tpu.vector_store %arg3[%c7_78, %c0_79, %c0_80], %90 {strides = array<i32>} : memref<8x64x8xf32, #tpu.memory_space<vmem>>, vector<1x64x8xf32>,
    return
  }
  func.func @transform_0(%arg0: i32, %arg1: i32) -> (i32, i32, i32, i32) {
    %c0_i32 = arith.constant 0 : i32
    %c0_i32_0 = arith.constant 0 : i32
    %c0_i32_1 = arith.constant 0 : i32
    %c0_i32_2 = arith.constant 0 : i32
    return %c0_i32, %c0_i32_0, %c0_i32_1, %arg0 : i32, i32, i32, i32
  }
  func.func @transform_1(%arg0: i32, %arg1: i32) -> (i32, i32, i32) {
    %c0_i32 = arith.constant 0 : i32
    %c0_i32_0 = arith.constant 0 : i32
    return %arg1, %c0_i32, %arg0 : i32, i32, i32
  }
}

</mosaic_0001>

<llo_original>
// kernel: deterministic_max_pool3d.1
$region0: #{deterministic_max_pool3d.1}
  #allocation0 [shape = 'u32[]', space=smem, size = 0x4, offset = 0x4, fixed_abs, tag = 'smem constant byte address 0x4 - core index']
  #allocation1 [shape = 'u32[144,128]{1,0:T(1,128)}', space=vmem, size = 0x12000, scoped, tag = 'internal scratch']
  #allocation2 [shape = 'f32[17,64,8]{2,1,0:T(8,128)}', space=vmem, size = 0x88000, scoped, tag = 'scratch operand']
  %s0 = inlined_call_operand.vmem [shape: f32[16,16,16,8], index: 0, kind: input, shape index: {}]
  %s1 = inlined_call_operand.vmem [shape: f32[8,64,8], index: 1, kind: output, shape index: {}]
  %s2 = sld [smem:[#allocation0]]
  $region21: #{deterministic_max_pool3d.1} parent=0
    _
  %s4 = ssub.s32 1, %s2
  %s5 = scalar_select 0, %s4, %s2
  // Predicated region
  $region2: #{deterministic_max_pool3d.1} parent=0 // pred_check
    _
  $region3: #{deterministic_max_pool3d.1} parent=0 // pred_check_branch
    %7 = sbr.rel (0) target = $region5
  $region4: #{deterministic_max_pool3d.1} parent=0 // pred_region
    _
  $region5: #{deterministic_max_pool3d.1} parent=0 // pred_fallthru
    _
  %s8 = smul.u32 0, 16
  %s9 = ssub.s32 %s8, 1
  loop: start=0, step=1, limit=17
  $region6: #{deterministic_max_pool3d.1} parent=0 // loop_pre_header
    _
  $region7: #{deterministic_max_pool3d.1} parent=0 // loop_header
    %s11 = sphi 0, %s15
    %p12 = scmp.ge.s32.totalorder %s11, 17
  $region8: #{deterministic_max_pool3d.1} parent=0 // loop_header_branch
    %14 = sbr.rel (%p12) target = $region12
  $region9: #{deterministic_max_pool3d.1} parent=0 // loop_body
    %s16 = sadd.s32 %s9, %s11
    %p17 = scmp.gt.s32.totalorder %s16, 0
    %s18 = scalar_select %p17, %s16, 0
    %p19 = scmp.lt.s32.totalorder %s18, 15
    %s20 = scalar_select %p19, %s18, 15
    %s21 = smul.u32 %s20, 256
    %s22 = scalar_lea.vmem %s0, %s21
    %v23 = vld [vmem:[%s22] sm:$0xff]
    %v24 = vld [vmem:[%s22 + $0x8] sm:$0xff]
    %v25 = vld [vmem:[%s22 + $0x10] sm:$0xff]
    %v26 = vld [vmem:[%s22 + $0x18] sm:$0xff]
    %v27 = vld [vmem:[%s22 + $0x20] sm:$0xff]
    %v28 = vld [vmem:[%s22 + $0x28] sm:$0xff]
    %v29 = vld [vmem:[%s22 + $0x30] sm:$0xff]
    %v30 = vld [vmem:[%s22 + $0x38] sm:$0xff]
    %v31 = vld [vmem:[%s22 + $0x40] sm:$0xff]
    %v32 = vld [vmem:[%s22 + $0x48] sm:$0xff]
    %v33 = vld [vmem:[%s22 + $0x50] sm:$0xff]
    %v34 = vld [vmem:[%s22 + $0x58] sm:$0xff]
    %v35 = vld [vmem:[%s22 + $0x60] sm:$0xff]
    %v36 = vld [vmem:[%s22 + $0x68] sm:$0xff]
    %v37 = vld [vmem:[%s22 + $0x70] sm:$0xff]
    %v38 = vld [vmem:[%s22 + $0x78] sm:$0xff]
    %v39 = vld [vmem:[%s22 + $0x80] sm:$0xff]
    %v40 = vld [vmem:[%s22 + $0x88] sm:$0xff]
    %v41 = vld [vmem:[%s22 + $0x90] sm:$0xff]
    %v42 = vld [vmem:[%s22 + $0x98] sm:$0xff]
    %v43 = vld [vmem:[%s22 + $0xa0] sm:$0xff]
    %v44 = vld [vmem:[%s22 + $0xa8] sm:$0xff]
    %v45 = vld [vmem:[%s22 + $0xb0] sm:$0xff]
    %v46 = vld [vmem:[%s22 + $0xb8] sm:$0xff]
    %v47 = vld [vmem:[%s22 + $0xc0] sm:$0xff]
    %v48 = vld [vmem:[%s22 + $0xc8] sm:$0xff]
    %v49 = vld [vmem:[%s22 + $0xd0] sm:$0xff]
    %v50 = vld [vmem:[%s22 + $0xd8] sm:$0xff]
    %v51 = vld [vmem:[%s22 + $0xe0] sm:$0xff]
    %v52 = vld [vmem:[%s22 + $0xe8] sm:$0xff]
    %v53 = vld [vmem:[%s22 + $0xf0] sm:$0xff]
    %v54 = vld [vmem:[%s22 + $0xf8] sm:$0xff]
    %vm87 = vcmask 1040384
    %v88 = vrot.slane %v23, 7
    %v89 = vrot.slane %v24, 7
    %v90 = vsel %vm87, %v88, %v89
    %v91 = vrot.slane %v25, 7
    %v92 = vrot.slane %v26, 7
    %v93 = vsel %vm87, %v91, %v92
    %v94 = vrot.slane %v27, 7
    %v95 = vrot.slane %v28, 7
    %v96 = vsel %vm87, %v94, %v95
    %v97 = vrot.slane %v29, 7
    %v98 = vrot.slane %v30, 7
    %v99 = vsel %vm87, %v97, %v98
    %v100 = vrot.slane %v31, 7
    %v101 = vrot.slane %v32, 7
    %v102 = vsel %vm87, %v100, %v101
    %v103 = vrot.slane %v33, 7
    %v104 = vrot.slane %v34, 7
    %v105 = vsel %vm87, %v103, %v104
    %v106 = vrot.slane %v35, 7
    %v107 = vrot.slane %v36, 7
    %v108 = vsel %vm87, %v106, %v107
    %v109 = vrot.slane %v37, 7
    %v110 = vrot.slane %v38, 7
    %v111 = vsel %vm87, %v109, %v110
    %v112 = vrot.slane %v39, 7
    %v113 = vrot.slane %v40, 7
    %v114 = vsel %vm87, %v112, %v113
    %v115 = vrot.slane %v41, 7
    %v116 = vrot.slane %v42, 7
    %v117 = vsel %vm87, %v115, %v116
    %v118 = vrot.slane %v43, 7
    %v119 = vrot.slane %v44, 7
    %v120 = vsel %vm87, %v118, %v119
    %v121 = vrot.slane %v45, 7
    %v122 = vrot.slane %v46, 7
    %v123 = vsel %vm87, %v121, %v122
    %v124 = vrot.slane %v47, 7
    %v125 = vrot.slane %v48, 7
    %v126 = vsel %vm87, %v124, %v125
    %v127 = vrot.slane %v49, 7
    %v128 = vrot.slane %v50, 7
    %v129 = vsel %vm87, %v127, %v128
    %v130 = vrot.slane %v51, 7
    %v131 = vrot.slane %v52, 7
    %v132 = vsel %vm87, %v130, %v131
    %v133 = vrot.slane %v53, 7
    %v134 = vrot.slane %v54, 7
    %v135 = vsel %vm87, %v133, %v134
    %v184 = vsel %vm87, -inf, %v88
    %v185 = vsel %vm87, -inf, %v91
    %v186 = vsel %vm87, -inf, %v94
    %v187 = vsel %vm87, -inf, %v97
    %v188 = vsel %vm87, -inf, %v100
    %v189 = vsel %vm87, -inf, %v103
    %v190 = vsel %vm87, -inf, %v106
    %v191 = vsel %vm87, -inf, %v109
    %v192 = vsel %vm87, -inf, %v112
    %v193 = vsel %vm87, -inf, %v115
    %v194 = vsel %vm87, -inf, %v118
    %v195 = vsel %vm87, -inf, %v121
    %v196 = vsel %vm87, -inf, %v124
    %v197 = vsel %vm87, -inf, %v127
    %v198 = vsel %vm87, -inf, %v130
    %v199 = vsel %vm87, -inf, %v133
    %v200 = vsel %vm87, %v89, -inf
    %v201 = vsel %vm87, %v92, -inf
    %v202 = vsel %vm87, %v95, -inf
    %v203 = vsel %vm87, %v98, -inf
    %v204 = vsel %vm87, %v101, -inf
    %v205 = vsel %vm87, %v104, -inf
    %v206 = vsel %vm87, %v107, -inf
    %v207 = vsel %vm87, %v110, -inf
    %v208 = vsel %vm87, %v113, -inf
    %v209 = vsel %vm87, %v116, -inf
    %v210 = vsel %vm87, %v119, -inf
    %v211 = vsel %vm87, %v122, -inf
    %v212 = vsel %vm87, %v125, -inf
    %v213 = vsel %vm87, %v128, -inf
    %v214 = vsel %vm87, %v131, -inf
    %v215 = vsel %vm87, %v134, -inf
    %vm248 = vcmask 1046528
    %v249 = vrot.slane %v184, 1
    %v250 = vrot.slane %v90, 1
    %v251 = vsel %vm248, %v249, %v250
    %v252 = vrot.slane %v200, 1
    %v253 = vsel %vm248, %v250, %v252
    %v254 = vrot.slane %v185, 1
    %v255 = vrot.slane %v93, 1
    %v256 = vsel %vm248, %v254, %v255
    %v257 = vrot.slane %v201, 1
    %v258 = vsel %vm248, %v255, %v257
    %v259 = vrot.slane %v186, 1
    %v260 = vrot.slane %v96, 1
    %v261 = vsel %vm248, %v259, %v260
    %v262 = vrot.slane %v202, 1
    %v263 = vsel %vm248, %v260, %v262
    %v264 = vrot.slane %v187, 1
    %v265 = vrot.slane %v99, 1
    %v266 = vsel %vm248, %v264, %v265
    %v267 = vrot.slane %v203, 1
    %v268 = vsel %vm248, %v265, %v267
    %v269 = vrot.slane %v188, 1
    %v270 = vrot.slane %v102, 1
    %v271 = vsel %vm248, %v269, %v270
    %v272 = vrot.slane %v204, 1
    %v273 = vsel %vm248, %v270, %v272
    %v274 = vrot.slane %v189, 1
    %v275 = vrot.slane %v105, 1
    %v276 = vsel %vm248, %v274, %v275
    %v277 = vrot.slane %v205, 1
    %v278 = vsel %vm248, %v275, %v277
    %v279 = vrot.slane %v190, 1
    %v280 = vrot.slane %v108, 1
    %v281 = vsel %vm248, %v279, %v280
    %v282 = vrot.slane %v206, 1
    %v283 = vsel %vm248, %v280, %v282
    %v284 = vrot.slane %v191, 1
    %v285 = vrot.slane %v111, 1
    %v286 = vsel %vm248, %v284, %v285
    %v287 = vrot.slane %v207, 1
    %v288 = vsel %vm248, %v285, %v287
    %v289 = vrot.slane %v192, 1
    %v290 = vrot.slane %v114, 1
    %v291 = vsel %vm248, %v289, %v290
    %v292 = vrot.slane %v208, 1
    %v293 = vsel %vm248, %v290, %v292
    %v294 = vrot.slane %v193, 1
    %v295 = vrot.slane %v117, 1
    %v296 = vsel %vm248, %v294, %v295
    %v297 = vrot.slane %v209, 1
    %v298 = vsel %vm248, %v295, %v297
    %v299 = vrot.slane %v194, 1
    %v300 = vrot.slane %v120, 1
    %v301 = vsel %vm248, %v299, %v300
    %v302 = vrot.slane %v210, 1
    %v303 = vsel %vm248, %v300, %v302
    %v304 = vrot.slane %v195, 1
    %v305 = vrot.slane %v123, 1
    %v306 = vsel %vm248, %v304, %v305
    %v307 = vrot.slane %v211, 1
    %v308 = vsel %vm248, %v305, %v307
    %v309 = vrot.slane %v196, 1
    %v310 = vrot.slane %v126, 1
    %v311 = vsel %vm248, %v309, %v310
    %v312 = vrot.slane %v212, 1
    %v313 = vsel %vm248, %v310, %v312
    %v314 = vrot.slane %v197, 1
    %v315 = vrot.slane %v129, 1
    %v316 = vsel %vm248, %v314, %v315
    %v317 = vrot.slane %v213, 1
    %v318 = vsel %vm248, %v315, %v317
    %v319 = vrot.slane %v198, 1
    %v320 = vrot.slane %v132, 1
    %v321 = vsel %vm248, %v319, %v320
    %v322 = vrot.slane %v214, 1
    %v323 = vsel %vm248, %v320, %v322
    %v324 = vrot.slane %v199, 1
    %v325 = vrot.slane %v135, 1
    %v326 = vsel %vm248, %v324, %v325
    %v327 = vrot.slane %v215, 1
    %v328 = vsel %vm248, %v325, %v327
    %v361 = vmax.f32 %v184, %v251
    %v362 = vmax.f32 %v90, %v253
    %v363 = vmax.f32 %v185, %v256
    %v364 = vmax.f32 %v93, %v258
    %v365 = vmax.f32 %v186, %v261
    %v366 = vmax.f32 %v96, %v263
    %v367 = vmax.f32 %v187, %v266
    %v368 = vmax.f32 %v99, %v268
    %v369 = vmax.f32 %v188, %v271
    %v370 = vmax.f32 %v102, %v273
    %v371 = vmax.f32 %v189, %v276
    %v372 = vmax.f32 %v105, %v278
    %v373 = vmax.f32 %v190, %v281
    %v374 = vmax.f32 %v108, %v283
    %v375 = vmax.f32 %v191, %v286
    %v376 = vmax.f32 %v111, %v288
    %v377 = vmax.f32 %v192, %v291
    %v378 = vmax.f32 %v114, %v293
    %v379 = vmax.f32 %v193, %v296
    %v380 = vmax.f32 %v117, %v298
    %v381 = vmax.f32 %v194, %v301
    %v382 = vmax.f32 %v120, %v303
    %v383 = vmax.f32 %v195, %v306
    %v384 = vmax.f32 %v123, %v308
    %v385 = vmax.f32 %v196, %v311
    %v386 = vmax.f32 %v126, %v313
    %v387 = vmax.f32 %v197, %v316
    %v388 = vmax.f32 %v129, %v318
    %v389 = vmax.f32 %v198, %v321
    %v390 = vmax.f32 %v132, %v323
    %v391 = vmax.f32 %v199, %v326
    %v392 = vmax.f32 %v135, %v328
    %vm393 = vcmask 1045504
    %v394 = vrot.slane %v184, 2
    %v395 = vrot.slane %v90, 2
    %v396 = vsel %vm393, %v394, %v395
    %v397 = vrot.slane %v200, 2
    %v398 = vsel %vm393, %v395, %v397
    %v399 = vrot.slane %v185, 2
    %v400 = vrot.slane %v93, 2
    %v401 = vsel %vm393, %v399, %v400
    %v402 = vrot.slane %v201, 2
    %v403 = vsel %vm393, %v400, %v402
    %v404 = vrot.slane %v186, 2
    %v405 = vrot.slane %v96, 2
    %v406 = vsel %vm393, %v404, %v405
    %v407 = vrot.slane %v202, 2
    %v408 = vsel %vm393, %v405, %v407
    %v409 = vrot.slane %v187, 2
    %v410 = vrot.slane %v99, 2
    %v411 = vsel %vm393, %v409, %v410
    %v412 = vrot.slane %v203, 2
    %v413 = vsel %vm393, %v410, %v412
    %v414 = vrot.slane %v188, 2
    %v415 = vrot.slane %v102, 2
    %v416 = vsel %vm393, %v414, %v415
    %v417 = vrot.slane %v204, 2
    %v418 = vsel %vm393, %v415, %v417
    %v419 = vrot.slane %v189, 2
    %v420 = vrot.slane %v105, 2
    %v421 = vsel %vm393, %v419, %v420
    %v422 = vrot.slane %v205, 2
    %v423 = vsel %vm393, %v420, %v422
    %v424 = vrot.slane %v190, 2
    %v425 = vrot.slane %v108, 2
    %v426 = vsel %vm393, %v424, %v425
    %v427 = vrot.slane %v206, 2
    %v428 = vsel %vm393, %v425, %v427
    %v429 = vrot.slane %v191, 2
    %v430 = vrot.slane %v111, 2
    %v431 = vsel %vm393, %v429, %v430
    %v432 = vrot.slane %v207, 2
    %v433 = vsel %vm393, %v430, %v432
    %v434 = vrot.slane %v192, 2
    %v435 = vrot.slane %v114, 2
    %v436 = vsel %vm393, %v434, %v435
    %v437 = vrot.slane %v208, 2
    %v438 = vsel %vm393, %v435, %v437
    %v439 = vrot.slane %v193, 2
    %v440 = vrot.slane %v117, 2
    %v441 = vsel %vm393, %v439, %v440
    %v442 = vrot.slane %v209, 2
    %v443 = vsel %vm393, %v440, %v442
    %v444 = vrot.slane %v194, 2
    %v445 = vrot.slane %v120, 2
    %v446 = vsel %vm393, %v444, %v445
    %v447 = vrot.slane %v210, 2
    %v448 = vsel %vm393, %v445, %v447
    %v449 = vrot.slane %v195, 2
    %v450 = vrot.slane %v123, 2
    %v451 = vsel %vm393, %v449, %v450
    %v452 = vrot.slane %v211, 2
    %v453 = vsel %vm393, %v450, %v452
    %v454 = vrot.slane %v196, 2
    %v455 = vrot.slane %v126, 2
    %v456 = vsel %vm393, %v454, %v455
    %v457 = vrot.slane %v212, 2
    %v458 = vsel %vm393, %v455, %v457
    %v459 = vrot.slane %v197, 2
    %v460 = vrot.slane %v129, 2
    %v461 = vsel %vm393, %v459, %v460
    %v462 = vrot.slane %v213, 2
    %v463 = vsel %vm393, %v460, %v462
    %v464 = vrot.slane %v198, 2
    %v465 = vrot.slane %v132, 2
    %v466 = vsel %vm393, %v464, %v465
    %v467 = vrot.slane %v214, 2
    %v468 = vsel %vm393, %v465, %v467
    %v469 = vrot.slane %v199, 2
    %v470 = vrot.slane %v135, 2
    %v471 = vsel %vm393, %v469, %v470
    %v472 = vrot.slane %v215, 2
    %v473 = vsel %vm393, %v470, %v472
    %v506 = vmax.f32 %v361, %v396
    %v507 = vmax.f32 %v362, %v398
    %v508 = vmax.f32 %v363, %v401
    %v509 = vmax.f32 %v364, %v403
    %v510 = vmax.f32 %v365, %v406
    %v511 = vmax.f32 %v366, %v408
    %v512 = vmax.f32 %v367, %v411
    %v513 = vmax.f32 %v368, %v413
    %v514 = vmax.f32 %v369, %v416
    %v515 = vmax.f32 %v370, %v418
    %v516 = vmax.f32 %v371, %v421
    %v517 = vmax.f32 %v372, %v423
    %v518 = vmax.f32 %v373, %v426
    %v519 = vmax.f32 %v374, %v428
    %v520 = vmax.f32 %v375, %v431
    %v521 = vmax.f32 %v376, %v433
    %v522 = vmax.f32 %v377, %v436
    %v523 = vmax.f32 %v378, %v438
    %v524 = vmax.f32 %v379, %v441
    %v525 = vmax.f32 %v380, %v443
    %v526 = vmax.f32 %v381, %v446
    %v527 = vmax.f32 %v382, %v448
    %v528 = vmax.f32 %v383, %v451
    %v529 = vmax.f32 %v384, %v453
    %v530 = vmax.f32 %v385, %v456
    %v531 = vmax.f32 %v386, %v458
    %v532 = vmax.f32 %v387, %v461
    %v533 = vmax.f32 %v388, %v463
    %v534 = vmax.f32 %v389, %v466
    %v535 = vmax.f32 %v390, %v468
    %v536 = vmax.f32 %v391, %v471
    %v537 = vmax.f32 %v392, %v473
    %v554 = vrot.slane %v506, 1
    %v555 = vrot.slane %v508, 1
    %v556 = vrot.slane %v510, 1
    %v557 = vrot.slane %v512, 1
    %v558 = vrot.slane %v514, 1
    %v559 = vrot.slane %v516, 1
    %v560 = vrot.slane %v518, 1
    %v561 = vrot.slane %v520, 1
    %v562 = vrot.slane %v522, 1
    %v563 = vrot.slane %v524, 1
    %v564 = vrot.slane %v526, 1
    %v565 = vrot.slane %v528, 1
    %v566 = vrot.slane %v530, 1
    %v567 = vrot.slane %v532, 1
    %v568 = vrot.slane %v534, 1
    %v569 = vrot.slane %v536, 1
    %v586 = vrot.slane %v506, 2
    %v587 = vrot.slane %v508, 2
    %v588 = vrot.slane %v510, 2
    %v589 = vrot.slane %v512, 2
    %v590 = vrot.slane %v514, 2
    %v591 = vrot.slane %v516, 2
    %v592 = vrot.slane %v518, 2
    %v593 = vrot.slane %v520, 2
    %v594 = vrot.slane %v522, 2
    %v595 = vrot.slane %v524, 2
    %v596 = vrot.slane %v526, 2
    %v597 = vrot.slane %v528, 2
    %v598 = vrot.slane %v530, 2
    %v599 = vrot.slane %v532, 2
    %v600 = vrot.slane %v534, 2
    %v601 = vrot.slane %v536, 2
    %v618 = vrot.slane %v506, 3
    %v619 = vrot.slane %v508, 3
    %v620 = vrot.slane %v510, 3
    %v621 = vrot.slane %v512, 3
    %v622 = vrot.slane %v514, 3
    %v623 = vrot.slane %v516, 3
    %v624 = vrot.slane %v518, 3
    %v625 = vrot.slane %v520, 3
    %v626 = vrot.slane %v522, 3
    %v627 = vrot.slane %v524, 3
    %v628 = vrot.slane %v526, 3
    %v629 = vrot.slane %v528, 3
    %v630 = vrot.slane %v530, 3
    %v631 = vrot.slane %v532, 3
    %v632 = vrot.slane %v534, 3
    %v633 = vrot.slane %v536, 3
    %v666 = vrot.slane %v507, 4
    %v667 = vrot.slane %v509, 4
    %v668 = vrot.slane %v511, 4
    %v669 = vrot.slane %v513, 4
    %v670 = vrot.slane %v515, 4
    %v671 = vrot.slane %v517, 4
    %v672 = vrot.slane %v519, 4
    %v673 = vrot.slane %v521, 4
    %v674 = vrot.slane %v523, 4
    %v675 = vrot.slane %v525, 4
    %v676 = vrot.slane %v527, 4
    %v677 = vrot.slane %v529, 4
    %v678 = vrot.slane %v531, 4
    %v679 = vrot.slane %v533, 4
    %v680 = vrot.slane %v535, 4
    %v681 = vrot.slane %v537, 4
    %v698 = vrot.slane %v507, 5
    %v699 = vrot.slane %v509, 5
    %v700 = vrot.slane %v511, 5
    %v701 = vrot.slane %v513, 5
    %v702 = vrot.slane %v515, 5
    %v703 = vrot.slane %v517, 5
    %v704 = vrot.slane %v519, 5
    %v705 = vrot.slane %v521, 5
    %v706 = vrot.slane %v523, 5
    %v707 = vrot.slane %v525, 5
    %v708 = vrot.slane %v527, 5
    %v709 = vrot.slane %v529, 5
    %v710 = vrot.slane %v531, 5
    %v711 = vrot.slane %v533, 5
    %v712 = vrot.slane %v535, 5
    %v713 = vrot.slane %v537, 5
    %v730 = vrot.slane %v507, 6
    %v731 = vrot.slane %v509, 6
    %v732 = vrot.slane %v511, 6
    %v733 = vrot.slane %v513, 6
    %v734 = vrot.slane %v515, 6
    %v735 = vrot.slane %v517, 6
    %v736 = vrot.slane %v519, 6
    %v737 = vrot.slane %v521, 6
    %v738 = vrot.slane %v523, 6
    %v739 = vrot.slane %v525, 6
    %v740 = vrot.slane %v527, 6
    %v741 = vrot.slane %v529, 6
    %v742 = vrot.slane %v531, 6
    %v743 = vrot.slane %v533, 6
    %v744 = vrot.slane %v535, 6
    %v745 = vrot.slane %v537, 6
    %v762 = vrot.slane %v507, 7
    %v763 = vrot.slane %v509, 7
    %v764 = vrot.slane %v511, 7
    %v765 = vrot.slane %v513, 7
    %v766 = vrot.slane %v515, 7
    %v767 = vrot.slane %v517, 7
    %v768 = vrot.slane %v519, 7
    %v769 = vrot.slane %v521, 7
    %v770 = vrot.slane %v523, 7
    %v771 = vrot.slane %v525, 7
    %v772 = vrot.slane %v527, 7
    %v773 = vrot.slane %v529, 7
    %v774 = vrot.slane %v531, 7
    %v775 = vrot.slane %v533, 7
    %v776 = vrot.slane %v535, 7
    %v777 = vrot.slane %v537, 7
    %v794 = vsel %vm87, %v506, %v554
    %v795 = vsel %vm87, %v508, %v555
    %v796 = vsel %vm87, %v510, %v556
    %v797 = vsel %vm87, %v512, %v557
    %v798 = vsel %vm87, %v514, %v558
    %v799 = vsel %vm87, %v516, %v559
    %v800 = vsel %vm87, %v518, %v560
    %v801 = vsel %vm87, %v520, %v561
    %v802 = vsel %vm87, %v522, %v562
    %v803 = vsel %vm87, %v524, %v563
    %v804 = vsel %vm87, %v526, %v564
    %v805 = vsel %vm87, %v528, %v565
    %v806 = vsel %vm87, %v530, %v566
    %v807 = vsel %vm87, %v532, %v567
    %v808 = vsel %vm87, %v534, %v568
    %v809 = vsel %vm87, %v536, %v569
    %vm810 = vcmask 1041408
    %v811 = vsel %vm810, %v794, %v586
    %v812 = vsel %vm810, %v795, %v587
    %v813 = vsel %vm810, %v796, %v588
    %v814 = vsel %vm810, %v797, %v589
    %v815 = vsel %vm810, %v798, %v590
    %v816 = vsel %vm810, %v799, %v591
    %v817 = vsel %vm810, %v800, %v592
    %v818 = vsel %vm810, %v801, %v593
    %v819 = vsel %vm810, %v802, %v594
    %v820 = vsel %vm810, %v803, %v595
    %v821 = vsel %vm810, %v804, %v596
    %v822 = vsel %vm810, %v805, %v597
    %v823 = vsel %vm810, %v806, %v598
    %v824 = vsel %vm810, %v807, %v599
    %v825 = vsel %vm810, %v808, %v600
    %v826 = vsel %vm810, %v809, %v601
    %vm827 = vcmask 1042432
    %v828 = vsel %vm827, %v811, %v618
    %v829 = vsel %vm827, %v812, %v619
    %v830 = vsel %vm827, %v813, %v620
    %v831 = vsel %vm827, %v814, %v621
    %v832 = vsel %vm827, %v815, %v622
    %v833 = vsel %vm827, %v816, %v623
    %v834 = vsel %vm827, %v817, %v624
    %v835 = vsel %vm827, %v818, %v625
    %v836 = vsel %vm827, %v819, %v626
    %v837 = vsel %vm827, %v820, %v627
    %v838 = vsel %vm827, %v821, %v628
    %v839 = vsel %vm827, %v822, %v629
    %v840 = vsel %vm827, %v823, %v630
    %v841 = vsel %vm827, %v824, %v631
    %v842 = vsel %vm827, %v825, %v632
    %v843 = vsel %vm827, %v826, %v633
    %vm844 = vcmask 1043456
    %v845 = vsel %vm844, %v828, %v666
    %v846 = vsel %vm844, %v829, %v667
    %v847 = vsel %vm844, %v830, %v668
    %v848 = vsel %vm844, %v831, %v669
    %v849 = vsel %vm844, %v832, %v670
    %v850 = vsel %vm844, %v833, %v671
    %v851 = vsel %vm844, %v834, %v672
    %v852 = vsel %vm844, %v835, %v673
    %v853 = vsel %vm844, %v836, %v674
    %v854 = vsel %vm844, %v837, %v675
    %v855 = vsel %vm844, %v838, %v676
    %v856 = vsel %vm844, %v839, %v677
    %v857 = vsel %vm844, %v840, %v678
    %v858 = vsel %vm844, %v841, %v679
    %v859 = vsel %vm844, %v842, %v680
    %v860 = vsel %vm844, %v843, %v681
    %vm861 = vcmask 1044480
    %v862 = vsel %vm861, %v845, %v698
    %v863 = vsel %vm861, %v846, %v699
    %v864 = vsel %vm861, %v847, %v700
    %v865 = vsel %vm861, %v848, %v701
    %v866 = vsel %vm861, %v849, %v702
    %v867 = vsel %vm861, %v850, %v703
    %v868 = vsel %vm861, %v851, %v704
    %v869 = vsel %vm861, %v852, %v705
    %v870 = vsel %vm861, %v853, %v706
    %v871 = vsel %vm861, %v854, %v707
    %v872 = vsel %vm861, %v855, %v708
    %v873 = vsel %vm861, %v856, %v709
    %v874 = vsel %vm861, %v857, %v710
    %v875 = vsel %vm861, %v858, %v711
    %v876 = vsel %vm861, %v859, %v712
    %v877 = vsel %vm861, %v860, %v713
    %v878 = vsel %vm393, %v862, %v730
    %v879 = vsel %vm393, %v863, %v731
    %v880 = vsel %vm393, %v864, %v732
    %v881 = vsel %vm393, %v865, %v733
    %v882 = vsel %vm393, %v866, %v734
    %v883 = vsel %vm393, %v867, %v735
    %v884 = vsel %vm393, %v868, %v736
    %v885 = vsel %vm393, %v869, %v737
    %v886 = vsel %vm393, %v870, %v738
    %v887 = vsel %vm393, %v871, %v739
    %v888 = vsel %vm393, %v872, %v740
    %v889 = vsel %vm393, %v873, %v741
    %v890 = vsel %vm393, %v874, %v742
    %v891 = vsel %vm393, %v875, %v743
    %v892 = vsel %vm393, %v876, %v744
    %v893 = vsel %vm393, %v877, %v745
    %v894 = vsel %vm248, %v878, %v762
    %v895 = vsel %vm248, %v879, %v763
    %v896 = vsel %vm248, %v880, %v764
    %v897 = vsel %vm248, %v881, %v765
    %v898 = vsel %vm248, %v882, %v766
    %v899 = vsel %vm248, %v883, %v767
    %v900 = vsel %vm248, %v884, %v768
    %v901 = vsel %vm248, %v885, %v769
    %v902 = vsel %vm248, %v886, %v770
    %v903 = vsel %vm248, %v887, %v771
    %v904 = vsel %vm248, %v888, %v772
    %v905 = vsel %vm248, %v889, %v773
    %v906 = vsel %vm248, %v890, %v774
    %v907 = vsel %vm248, %v891, %v775
    %v908 = vsel %vm248, %v892, %v776
    %v909 = vsel %vm248, %v893, %v777
    %v910 = vmax.f32 %v895, %v896
    %v911 = vmax.f32 %v897, %v898
    %v912 = vmax.f32 %v899, %v900
    %v913 = vmax.f32 %v901, %v902
    %v914 = vmax.f32 %v903, %v904
    %v915 = vmax.f32 %v905, %v906
    %v916 = vmax.f32 %v907, %v908
    %v917 = vmax.f32 %v894, %v895
    %v918 = vmax.f32 %v910, %v897
    %v919 = vmax.f32 %v911, %v899
    %v920 = vmax.f32 %v912, %v901
    %v921 = vmax.f32 %v913, %v903
    %v922 = vmax.f32 %v914, %v905
    %v923 = vmax.f32 %v915, %v907
    %v924 = vmax.f32 %v916, %v909
    %p925 = scmp.ge.s32.totalorder %s16, 0
    %p926 = scmp.lt.s32.totalorder %s16, 16
    %p927 = pnand %p925, %p926
    %p928 = pneg %p927
    %s929 = scalar_select %p928, 1, 0
    %v930 = vstv %s929
    %vm931 = vcmp.eq.s32.totalorder %v930, 1
    %v932 = vsel %vm931, %v917, -inf
    %v933 = vsel %vm931, %v918, -inf
    %v934 = vsel %vm931, %v919, -inf
    %v935 = vsel %vm931, %v920, -inf
    %v936 = vsel %vm931, %v921, -inf
    %v937 = vsel %vm931, %v922, -inf
    %v938 = vsel %vm931, %v923, -inf
    %v939 = vsel %vm931, %v924, -inf
    %s940 = smul.u32 %s11, 64
    %s941 = scalar_lea.vmem [#allocation2], %s940
    %vm942 = vcmask 64512
    %943 = vst.msk [vmem:[%s941] sm:$0xff] %vm942, %v932
    %944 = vst.msk [vmem:[%s941 + $0x8] sm:$0xff] %vm942, %v933
    %945 = vst.msk [vmem:[%s941 + $0x10] sm:$0xff] %vm942, %v934
    %946 = vst.msk [vmem:[%s941 + $0x18] sm:$0xff] %vm942, %v935
    %947 = vst.msk [vmem:[%s941 + $0x20] sm:$0xff] %vm942, %v936
    %948 = vst.msk [vmem:[%s941 + $0x28] sm:$0xff] %vm942, %v937
    %949 = vst.msk [vmem:[%s941 + $0x30] sm:$0xff] %vm942, %v938
    %950 = vst.msk [vmem:[%s941 + $0x38] sm:$0xff] %vm942, %v939
  $region10: #{deterministic_max_pool3d.1} parent=0 // loop_footer
    %s15 = sadd.s32 1, %s11
  $region11: #{deterministic_max_pool3d.1} parent=0 // loop_footer_branch
    %10 = sbr.rel target = $region7
  $region12: #{deterministic_max_pool3d.1} parent=0 // loop_exit
    _
  %v951 = vld [vmem:[#allocation2] sm:$0xff]
  %v952 = vld [vmem:[#allocation2 + $0x8] sm:$0xff]
  %v953 = vld [vmem:[#allocation2 + $0x10] sm:$0xff]
  %v954 = vld [vmem:[#allocation2 + $0x18] sm:$0xff]
  %v955 = vld [vmem:[#allocation2 + $0x20] sm:$0xff]
  %v956 = vld [vmem:[#allocation2 + $0x28] sm:$0xff]
  %v957 = vld [vmem:[#allocation2 + $0x30] sm:$0xff]
  %v958 = vld [vmem:[#allocation2 + $0x38] sm:$0xff]
  %s959 = scalar_lea.vmem [#allocation2], 64
  %v960 = vld [vmem:[%s959] sm:$0xff]
  %v961 = vld [vmem:[%s959 + $0x8] sm:$0xff]
  %v962 = vld [vmem:[%s959 + $0x10] sm:$0xff]
  %v963 = vld [vmem:[%s959 + $0x18] sm:$0xff]
  %v964 = vld [vmem:[%s959 + $0x20] sm:$0xff]
  %v965 = vld [vmem:[%s959 + $0x28] sm:$0xff]
  %v966 = vld [vmem:[%s959 + $0x30] sm:$0xff]
  %v967 = vld [vmem:[%s959 + $0x38] sm:$0xff]
  %v968 = vmax.f32 %v951, %v960
  %v969 = vmax.f32 %v952, %v961
  %v970 = vmax.f32 %v953, %v962
  %v971 = vmax.f32 %v954, %v963
  %v972 = vmax.f32 %v955, %v964
  %v973 = vmax.f32 %v956, %v965
  %v974 = vmax.f32 %v957, %v966
  %v975 = vmax.f32 %v958, %v967
  %s976 = scalar_lea.vmem [#allocation2], 128
  %v977 = vld [vmem:[%s976] sm:$0xff]
  %v978 = vld [vmem:[%s976 + $0x8] sm:$0xff]
  %v979 = vld [vmem:[%s976 + $0x10] sm:$0xff]
  %v980 = vld [vmem:[%s976 + $0x18] sm:$0xff]
  %v981 = vld [vmem:[%s976 + $0x20] sm:$0xff]
  %v982 = vld [vmem:[%s976 + $0x28] sm:$0xff]
  %v983 = vld [vmem:[%s976 + $0x30] sm:$0xff]
  %v984 = vld [vmem:[%s976 + $0x38] sm:$0xff]
  %v985 = vmax.f32 %v968, %v977
  %v986 = vmax.f32 %v969, %v978
  %v987 = vmax.f32 %v970, %v979
  %v988 = vmax.f32 %v971, %v980
  %v989 = vmax.f32 %v972, %v981
  %v990 = vmax.f32 %v973, %v982
  %v991 = vmax.f32 %v974, %v983
  %v992 = vmax.f32 %v975, %v984
  %vm993 = vcmask 64512
  %994 = vst.msk [vmem:[%s1] sm:$0xff] %vm993, %v985
  %995 = vst.msk [vmem:[%s1 + $0x8] sm:$0xff] %vm993, %v986
  %996 = vst.msk [vmem:[%s1 + $0x10] sm:$0xff] %vm993, %v987
  %997 = vst.msk [vmem:[%s1 + $0x18] sm:$0xff] %vm993, %v988
  %998 = vst.msk [vmem:[%s1 + $0x20] sm:$0xff] %vm993, %v989
  %999 = vst.msk [vmem:[%s1 + $0x28] sm:$0xff] %vm993, %v990
  %1000 = vst.msk [vmem:[%s1 + $0x30] sm:$0xff] %vm993, %v991
  %1001 = vst.msk [vmem:[%s1 + $0x38] sm:$0xff] %vm993, %v992
  %v1002 = vld [vmem:[%s976] sm:$0xff]
  %v1003 = vld [vmem:[%s976 + $0x8] sm:$0xff]
  %v1004 = vld [vmem:[%s976 + $0x10] sm:$0xff]
  %v1005 = vld [vmem:[%s976 + $0x18] sm:$0xff]
  %v1006 = vld [vmem:[%s976 + $0x20] sm:$0xff]
  %v1007 = vld [vmem:[%s976 + $0x28] sm:$0xff]
  %v1008 = vld [vmem:[%s976 + $0x30] sm:$0xff]
  %v1009 = vld [vmem:[%s976 + $0x38] sm:$0xff]
  %s1010 = scalar_lea.vmem [#allocation2], 192
  %v1011 = vld [vmem:[%s1010] sm:$0xff]
  %v1012 = vld [vmem:[%s1010 + $0x8] sm:$0xff]
  %v1013 = vld [vmem:[%s1010 + $0x10] sm:$0xff]
  %v1014 = vld [vmem:[%s1010 + $0x18] sm:$0xff]
  %v1015 = vld [vmem:[%s1010 + $0x20] sm:$0xff]
  %v1016 = vld [vmem:[%s1010 + $0x28] sm:$0xff]
  %v1017 = vld [vmem:[%s1010 + $0x30] sm:$0xff]
  %v1018 = vld [vmem:[%s1010 + $0x38] sm:$0xff]
  %v1019 = vmax.f32 %v1002, %v1011
  %v1020 = vmax.f32 %v1003, %v1012
  %v1021 = vmax.f32 %v1004, %v1013
  %v1022 = vmax.f32 %v1005, %v1014
  %v1023 = vmax.f32 %v1006, %v1015
  %v1024 = vmax.f32 %v1007, %v1016
  %v1025 = vmax.f32 %v1008, %v1017
  %v1026 = vmax.f32 %v1009, %v1018
  %s1027 = scalar_lea.vmem [#allocation2], 256
  %v1028 = vld [vmem:[%s1027] sm:$0xff]
  %v1029 = vld [vmem:[%s1027 + $0x8] sm:$0xff]
  %v1030 = vld [vmem:[%s1027 + $0x10] sm:$0xff]
  %v1031 = vld [vmem:[%s1027 + $0x18] sm:$0xff]
  %v1032 = vld [vmem:[%s1027 + $0x20] sm:$0xff]
  %v1033 = vld [vmem:[%s1027 + $0x28] sm:$0xff]
  %v1034 = vld [vmem:[%s1027 + $0x30] sm:$0xff]
  %v1035 = vld [vmem:[%s1027 + $0x38] sm:$0xff]
  %v1036 = vmax.f32 %v1019, %v1028
  %v1037 = vmax.f32 %v1020, %v1029
  %v1038 = vmax.f32 %v1021, %v1030
  %v1039 = vmax.f32 %v1022, %v1031
  %v1040 = vmax.f32 %v1023, %v1032
  %v1041 = vmax.f32 %v1024, %v1033
  %v1042 = vmax.f32 %v1025, %v1034
  %v1043 = vmax.f32 %v1026, %v1035
  %s1044 = scalar_lea.vmem %s1, 64
  %1045 = vst.msk [vmem:[%s1044] sm:$0xff] %vm993, %v1036
  %1046 = vst.msk [vmem:[%s1044 + $0x8] sm:$0xff] %vm993, %v1037
  %1047 = vst.msk [vmem:[%s1044 + $0x10] sm:$0xff] %vm993, %v1038
  %1048 = vst.msk [vmem:[%s1044 + $0x18] sm:$0xff] %vm993, %v1039
  %1049 = vst.msk [vmem:[%s1044 + $0x20] sm:$0xff] %vm993, %v1040
  %1050 = vst.msk [vmem:[%s1044 + $0x28] sm:$0xff] %vm993, %v1041
  %1051 = vst.msk [vmem:[%s1044 + $0x30] sm:$0xff] %vm993, %v1042
  %1052 = vst.msk [vmem:[%s1044 + $0x38] sm:$0xff] %vm993, %v1043
  %v1053 = vld [vmem:[%s1027] sm:$0xff]
  %v1054 = vld [vmem:[%s1027 + $0x8] sm:$0xff]
  %v1055 = vld [vmem:[%s1027 + $0x10] sm:$0xff]
  %v1056 = vld [vmem:[%s1027 + $0x18] sm:$0xff]
  %v1057 = vld [vmem:[%s1027 + $0x20] sm:$0xff]
  %v1058 = vld [vmem:[%s1027 + $0x28] sm:$0xff]
  %v1059 = vld [vmem:[%s1027 + $0x30] sm:$0xff]
  %v1060 = vld [vmem:[%s1027 + $0x38] sm:$0xff]
  %s1061 = scalar_lea.vmem [#allocation2], 320
  %v1062 = vld [vmem:[%s1061] sm:$0xff]
  %v1063 = vld [vmem:[%s1061 + $0x8] sm:$0xff]
  %v1064 = vld [vmem:[%s1061 + $0x10] sm:$0xff]
  %v1065 = vld [vmem:[%s1061 + $0x18] sm:$0xff]
  %v1066 = vld [vmem:[%s1061 + $0x20] sm:$0xff]
  %v1067 = vld [vmem:[%s1061 + $0x28] sm:$0xff]
  %v1068 = vld [vmem:[%s1061 + $0x30] sm:$0xff]
  %v1069 = vld [vmem:[%s1061 + $0x38] sm:$0xff]
  %v1070 = vmax.f32 %v1053, %v1062
  %v1071 = vmax.f32 %v1054, %v1063
  %v1072 = vmax.f32 %v1055, %v1064
  %v1073 = vmax.f32 %v1056, %v1065
  %v1074 = vmax.f32 %v1057, %v1066
  %v1075 = vmax.f32 %v1058, %v1067
  %v1076 = vmax.f32 %v1059, %v1068
  %v1077 = vmax.f32 %v1060, %v1069
  %s1078 = scalar_lea.vmem [#allocation2], 384
  %v1079 = vld [vmem:[%s1078] sm:$0xff]
  %v1080 = vld [vmem:[%s1078 + $0x8] sm:$0xff]
  %v1081 = vld [vmem:[%s1078 + $0x10] sm:$0xff]
  %v1082 = vld [vmem:[%s1078 + $0x18] sm:$0xff]
  %v1083 = vld [vmem:[%s1078 + $0x20] sm:$0xff]
  %v1084 = vld [vmem:[%s1078 + $0x28] sm:$0xff]
  %v1085 = vld [vmem:[%s1078 + $0x30] sm:$0xff]
  %v1086 = vld [vmem:[%s1078 + $0x38] sm:$0xff]
  %v1087 = vmax.f32 %v1070, %v1079
  %v1088 = vmax.f32 %v1071, %v1080
  %v1089 = vmax.f32 %v1072, %v1081
  %v1090 = vmax.f32 %v1073, %v1082
  %v1091 = vmax.f32 %v1074, %v1083
  %v1092 = vmax.f32 %v1075, %v1084
  %v1093 = vmax.f32 %v1076, %v1085
  %v1094 = vmax.f32 %v1077, %v1086
  %s1095 = scalar_lea.vmem %s1, 128
  %1096 = vst.msk [vmem:[%s1095] sm:$0xff] %vm993, %v1087
  %1097 = vst.msk [vmem:[%s1095 + $0x8] sm:$0xff] %vm993, %v1088
  %1098 = vst.msk [vmem:[%s1095 + $0x10] sm:$0xff] %vm993, %v1089
  %1099 = vst.msk [vmem:[%s1095 + $0x18] sm:$0xff] %vm993, %v1090
  %1100 = vst.msk [vmem:[%s1095 + $0x20] sm:$0xff] %vm993, %v1091
  %1101 = vst.msk [vmem:[%s1095 + $0x28] sm:$0xff] %vm993, %v1092
  %1102 = vst.msk [vmem:[%s1095 + $0x30] sm:$0xff] %vm993, %v1093
  %1103 = vst.msk [vmem:[%s1095 + $0x38] sm:$0xff] %vm993, %v1094
  %v1104 = vld [vmem:[%s1078] sm:$0xff]
  %v1105 = vld [vmem:[%s1078 + $0x8] sm:$0xff]
  %v1106 = vld [vmem:[%s1078 + $0x10] sm:$0xff]
  %v1107 = vld [vmem:[%s1078 + $0x18] sm:$0xff]
  %v1108 = vld [vmem:[%s1078 + $0x20] sm:$0xff]
  %v1109 = vld [vmem:[%s1078 + $0x28] sm:$0xff]
  %v1110 = vld [vmem:[%s1078 + $0x30] sm:$0xff]
  %v1111 = vld [vmem:[%s1078 + $0x38] sm:$0xff]
  %s1112 = scalar_lea.vmem [#allocation2], 448
  %v1113 = vld [vmem:[%s1112] sm:$0xff]
  %v1114 = vld [vmem:[%s1112 + $0x8] sm:$0xff]
  %v1115 = vld [vmem:[%s1112 + $0x10] sm:$0xff]
  %v1116 = vld [vmem:[%s1112 + $0x18] sm:$0xff]
  %v1117 = vld [vmem:[%s1112 + $0x20] sm:$0xff]
  %v1118 = vld [vmem:[%s1112 + $0x28] sm:$0xff]
  %v1119 = vld [vmem:[%s1112 + $0x30] sm:$0xff]
  %v1120 = vld [vmem:[%s1112 + $0x38] sm:$0xff]
  %v1121 = vmax.f32 %v1104, %v1113
  %v1122 = vmax.f32 %v1105, %v1114
  %v1123 = vmax.f32 %v1106, %v1115
  %v1124 = vmax.f32 %v1107, %v1116
  %v1125 = vmax.f32 %v1108, %v1117
  %v1126 = vmax.f32 %v1109, %v1118
  %v1127 = vmax.f32 %v1110, %v1119
  %v1128 = vmax.f32 %v1111, %v1120
  %s1129 = scalar_lea.vmem [#allocation2], 512
  %v1130 = vld [vmem:[%s1129] sm:$0xff]
  %v1131 = vld [vmem:[%s1129 + $0x8] sm:$0xff]
  %v1132 = vld [vmem:[%s1129 + $0x10] sm:$0xff]
  %v1133 = vld [vmem:[%s1129 + $0x18] sm:$0xff]
  %v1134 = vld [vmem:[%s1129 + $0x20] sm:$0xff]
  %v1135 = vld [vmem:[%s1129 + $0x28] sm:$0xff]
  %v1136 = vld [vmem:[%s1129 + $0x30] sm:$0xff]
  %v1137 = vld [vmem:[%s1129 + $0x38] sm:$0xff]
  %v1138 = vmax.f32 %v1121, %v1130
  %v1139 = vmax.f32 %v1122, %v1131
  %v1140 = vmax.f32 %v1123, %v1132
  %v1141 = vmax.f32 %v1124, %v1133
  %v1142 = vmax.f32 %v1125, %v1134
  %v1143 = vmax.f32 %v1126, %v1135
  %v1144 = vmax.f32 %v1127, %v1136
  %v1145 = vmax.f32 %v1128, %v1137
  %s1146 = scalar_lea.vmem %s1, 192
  %1147 = vst.msk [vmem:[%s1146] sm:$0xff] %vm993, %v1138
  %1148 = vst.msk [vmem:[%s1146 + $0x8] sm:$0xff] %vm993, %v1139
  %1149 = vst.msk [vmem:[%s1146 + $0x10] sm:$0xff] %vm993, %v1140
  %1150 = vst.msk [vmem:[%s1146 + $0x18] sm:$0xff] %vm993, %v1141
  %1151 = vst.msk [vmem:[%s1146 + $0x20] sm:$0xff] %vm993, %v1142
  %1152 = vst.msk [vmem:[%s1146 + $0x28] sm:$0xff] %vm993, %v1143
  %1153 = vst.msk [vmem:[%s1146 + $0x30] sm:$0xff] %vm993, %v1144
  %1154 = vst.msk [vmem:[%s1146 + $0x38] sm:$0xff] %vm993, %v1145
  %v1155 = vld [vmem:[%s1129] sm:$0xff]
  %v1156 = vld [vmem:[%s1129 + $0x8] sm:$0xff]
  %v1157 = vld [vmem:[%s1129 + $0x10] sm:$0xff]
  %v1158 = vld [vmem:[%s1129 + $0x18] sm:$0xff]
  %v1159 = vld [vmem:[%s1129 + $0x20] sm:$0xff]
  %v1160 = vld [vmem:[%s1129 + $0x28] sm:$0xff]
  %v1161 = vld [vmem:[%s1129 + $0x30] sm:$0xff]
  %v1162 = vld [vmem:[%s1129 + $0x38] sm:$0xff]
  %s1163 = scalar_lea.vmem [#allocation2], 576
  %v1164 = vld [vmem:[%s1163] sm:$0xff]
  %v1165 = vld [vmem:[%s1163 + $0x8] sm:$0xff]
  %v1166 = vld [vmem:[%s1163 + $0x10] sm:$0xff]
  %v1167 = vld [vmem:[%s1163 + $0x18] sm:$0xff]
  %v1168 = vld [vmem:[%s1163 + $0x20] sm:$0xff]
  %v1169 = vld [vmem:[%s1163 + $0x28] sm:$0xff]
  %v1170 = vld [vmem:[%s1163 + $0x30] sm:$0xff]
  %v1171 = vld [vmem:[%s1163 + $0x38] sm:$0xff]
  %v1172 = vmax.f32 %v1155, %v1164
  %v1173 = vmax.f32 %v1156, %v1165
  %v1174 = vmax.f32 %v1157, %v1166
  %v1175 = vmax.f32 %v1158, %v1167
  %v1176 = vmax.f32 %v1159, %v1168
  %v1177 = vmax.f32 %v1160, %v1169
  %v1178 = vmax.f32 %v1161, %v1170
  %v1179 = vmax.f32 %v1162, %v1171
  %s1180 = scalar_lea.vmem [#allocation2], 640
  %v1181 = vld [vmem:[%s1180] sm:$0xff]
  %v1182 = vld [vmem:[%s1180 + $0x8] sm:$0xff]
  %v1183 = vld [vmem:[%s1180 + $0x10] sm:$0xff]
  %v1184 = vld [vmem:[%s1180 + $0x18] sm:$0xff]
  %v1185 = vld [vmem:[%s1180 + $0x20] sm:$0xff]
  %v1186 = vld [vmem:[%s1180 + $0x28] sm:$0xff]
  %v1187 = vld [vmem:[%s1180 + $0x30] sm:$0xff]
  %v1188 = vld [vmem:[%s1180 + $0x38] sm:$0xff]
  %v1189 = vmax.f32 %v1172, %v1181
  %v1190 = vmax.f32 %v1173, %v1182
  %v1191 = vmax.f32 %v1174, %v1183
  %v1192 = vmax.f32 %v1175, %v1184
  %v1193 = vmax.f32 %v1176, %v1185
  %v1194 = vmax.f32 %v1177, %v1186
  %v1195 = vmax.f32 %v1178, %v1187
  %v1196 = vmax.f32 %v1179, %v1188
  %s1197 = scalar_lea.vmem %s1, 256
  %1198 = vst.msk [vmem:[%s1197] sm:$0xff] %vm993, %v1189
  %1199 = vst.msk [vmem:[%s1197 + $0x8] sm:$0xff] %vm993, %v1190
  %1200 = vst.msk [vmem:[%s1197 + $0x10] sm:$0xff] %vm993, %v1191
  %1201 = vst.msk [vmem:[%s1197 + $0x18] sm:$0xff] %vm993, %v1192
  %1202 = vst.msk [vmem:[%s1197 + $0x20] sm:$0xff] %vm993, %v1193
  %1203 = vst.msk [vmem:[%s1197 + $0x28] sm:$0xff] %vm993, %v1194
  %1204 = vst.msk [vmem:[%s1197 + $0x30] sm:$0xff] %vm993, %v1195
  %1205 = vst.msk [vmem:[%s1197 + $0x38] sm:$0xff] %vm993, %v1196
  %v1206 = vld [vmem:[%s1180] sm:$0xff]
  %v1207 = vld [vmem:[%s1180 + $0x8] sm:$0xff]
  %v1208 = vld [vmem:[%s1180 + $0x10] sm:$0xff]
  %v1209 = vld [vmem:[%s1180 + $0x18] sm:$0xff]
  %v1210 = vld [vmem:[%s1180 + $0x20] sm:$0xff]
  %v1211 = vld [vmem:[%s1180 + $0x28] sm:$0xff]
  %v1212 = vld [vmem:[%s1180 + $0x30] sm:$0xff]
  %v1213 = vld [vmem:[%s1180 + $0x38] sm:$0xff]
  %s1214 = scalar_lea.vmem [#allocation2], 704
  %v1215 = vld [vmem:[%s1214] sm:$0xff]
  %v1216 = vld [vmem:[%s1214 + $0x8] sm:$0xff]
  %v1217 = vld [vmem:[%s1214 + $0x10] sm:$0xff]
  %v1218 = vld [vmem:[%s1214 + $0x18] sm:$0xff]
  %v1219 = vld [vmem:[%s1214 + $0x20] sm:$0xff]
  %v1220 = vld [vmem:[%s1214 + $0x28] sm:$0xff]
  %v1221 = vld [vmem:[%s1214 + $0x30] sm:$0xff]
  %v1222 = vld [vmem:[%s1214 + $0x38] sm:$0xff]
  %v1223 = vmax.f32 %v1206, %v1215
  %v1224 = vmax.f32 %v1207, %v1216
  %v1225 = vmax.f32 %v1208, %v1217
  %v1226 = vmax.f32 %v1209, %v1218
  %v1227 = vmax.f32 %v1210, %v1219
  %v1228 = vmax.f32 %v1211, %v1220
  %v1229 = vmax.f32 %v1212, %v1221
  %v1230 = vmax.f32 %v1213, %v1222
  %s1231 = scalar_lea.vmem [#allocation2], 768
  %v1232 = vld [vmem:[%s1231] sm:$0xff]
  %v1233 = vld [vmem:[%s1231 + $0x8] sm:$0xff]
  %v1234 = vld [vmem:[%s1231 + $0x10] sm:$0xff]
  %v1235 = vld [vmem:[%s1231 + $0x18] sm:$0xff]
  %v1236 = vld [vmem:[%s1231 + $0x20] sm:$0xff]
  %v1237 = vld [vmem:[%s1231 + $0x28] sm:$0xff]
  %v1238 = vld [vmem:[%s1231 + $0x30] sm:$0xff]
  %v1239 = vld [vmem:[%s1231 + $0x38] sm:$0xff]
  %v1240 = vmax.f32 %v1223, %v1232
  %v1241 = vmax.f32 %v1224, %v1233
  %v1242 = vmax.f32 %v1225, %v1234
  %v1243 = vmax.f32 %v1226, %v1235
  %v1244 = vmax.f32 %v1227, %v1236
  %v1245 = vmax.f32 %v1228, %v1237
  %v1246 = vmax.f32 %v1229, %v1238
  %v1247 = vmax.f32 %v1230, %v1239
  %s1248 = scalar_lea.vmem %s1, 320
  %1249 = vst.msk [vmem:[%s1248] sm:$0xff] %vm993, %v1240
  %1250 = vst.msk [vmem:[%s1248 + $0x8] sm:$0xff] %vm993, %v1241
  %1251 = vst.msk [vmem:[%s1248 + $0x10] sm:$0xff] %vm993, %v1242
  %1252 = vst.msk [vmem:[%s1248 + $0x18] sm:$0xff] %vm993, %v1243
  %1253 = vst.msk [vmem:[%s1248 + $0x20] sm:$0xff] %vm993, %v1244
  %1254 = vst.msk [vmem:[%s1248 + $0x28] sm:$0xff] %vm993, %v1245
  %1255 = vst.msk [vmem:[%s1248 + $0x30] sm:$0xff] %vm993, %v1246
  %1256 = vst.msk [vmem:[%s1248 + $0x38] sm:$0xff] %vm993, %v1247
  %v1257 = vld [vmem:[%s1231] sm:$0xff]
  %v1258 = vld [vmem:[%s1231 + $0x8] sm:$0xff]
  %v1259 = vld [vmem:[%s1231 + $0x10] sm:$0xff]
  %v1260 = vld [vmem:[%s1231 + $0x18] sm:$0xff]
  %v1261 = vld [vmem:[%s1231 + $0x20] sm:$0xff]
  %v1262 = vld [vmem:[%s1231 + $0x28] sm:$0xff]
  %v1263 = vld [vmem:[%s1231 + $0x30] sm:$0xff]
  %v1264 = vld [vmem:[%s1231 + $0x38] sm:$0xff]
  %s1265 = scalar_lea.vmem [#allocation2], 832
  %v1266 = vld [vmem:[%s1265] sm:$0xff]
  %v1267 = vld [vmem:[%s1265 + $0x8] sm:$0xff]
  %v1268 = vld [vmem:[%s1265 + $0x10] sm:$0xff]
  %v1269 = vld [vmem:[%s1265 + $0x18] sm:$0xff]
  %v1270 = vld [vmem:[%s1265 + $0x20] sm:$0xff]
  %v1271 = vld [vmem:[%s1265 + $0x28] sm:$0xff]
  %v1272 = vld [vmem:[%s1265 + $0x30] sm:$0xff]
  %v1273 = vld [vmem:[%s1265 + $0x38] sm:$0xff]
  %v1274 = vmax.f32 %v1257, %v1266
  %v1275 = vmax.f32 %v1258, %v1267
  %v1276 = vmax.f32 %v1259, %v1268
  %v1277 = vmax.f32 %v1260, %v1269
  %v1278 = vmax.f32 %v1261, %v1270
  %v1279 = vmax.f32 %v1262, %v1271
  %v1280 = vmax.f32 %v1263, %v1272
  %v1281 = vmax.f32 %v1264, %v1273
  %s1282 = scalar_lea.vmem [#allocation2], 896
  %v1283 = vld [vmem:[%s1282] sm:$0xff]
  %v1284 = vld [vmem:[%s1282 + $0x8] sm:$0xff]
  %v1285 = vld [vmem:[%s1282 + $0x10] sm:$0xff]
  %v1286 = vld [vmem:[%s1282 + $0x18] sm:$0xff]
  %v1287 = vld [vmem:[%s1282 + $0x20] sm:$0xff]
  %v1288 = vld [vmem:[%s1282 + $0x28] sm:$0xff]
  %v1289 = vld [vmem:[%s1282 + $0x30] sm:$0xff]
  %v1290 = vld [vmem:[%s1282 + $0x38] sm:$0xff]
  %v1291 = vmax.f32 %v1274, %v1283
  %v1292 = vmax.f32 %v1275, %v1284
  %v1293 = vmax.f32 %v1276, %v1285
  %v1294 = vmax.f32 %v1277, %v1286
  %v1295 = vmax.f32 %v1278, %v1287
  %v1296 = vmax.f32 %v1279, %v1288
  %v1297 = vmax.f32 %v1280, %v1289
  %v1298 = vmax.f32 %v1281, %v1290
  %s1299 = scalar_lea.vmem %s1, 384
  %1300 = vst.msk [vmem:[%s1299] sm:$0xff] %vm993, %v1291
  %1301 = vst.msk [vmem:[%s1299 + $0x8] sm:$0xff] %vm993, %v1292
  %1302 = vst.msk [vmem:[%s1299 + $0x10] sm:$0xff] %vm993, %v1293
  %1303 = vst.msk [vmem:[%s1299 + $0x18] sm:$0xff] %vm993, %v1294
  %1304 = vst.msk [vmem:[%s1299 + $0x20] sm:$0xff] %vm993, %v1295
  %1305 = vst.msk [vmem:[%s1299 + $0x28] sm:$0xff] %vm993, %v1296
  %1306 = vst.msk [vmem:[%s1299 + $0x30] sm:$0xff] %vm993, %v1297
  %1307 = vst.msk [vmem:[%s1299 + $0x38] sm:$0xff] %vm993, %v1298
  %v1308 = vld [vmem:[%s1282] sm:$0xff]
  %v1309 = vld [vmem:[%s1282 + $0x8] sm:$0xff]
  %v1310 = vld [vmem:[%s1282 + $0x10] sm:$0xff]
  %v1311 = vld [vmem:[%s1282 + $0x18] sm:$0xff]
  %v1312 = vld [vmem:[%s1282 + $0x20] sm:$0xff]
  %v1313 = vld [vmem:[%s1282 + $0x28] sm:$0xff]
  %v1314 = vld [vmem:[%s1282 + $0x30] sm:$0xff]
  %v1315 = vld [vmem:[%s1282 + $0x38] sm:$0xff]
  %s1316 = scalar_lea.vmem [#allocation2], 960
  %v1317 = vld [vmem:[%s1316] sm:$0xff]
  %v1318 = vld [vmem:[%s1316 + $0x8] sm:$0xff]
  %v1319 = vld [vmem:[%s1316 + $0x10] sm:$0xff]
  %v1320 = vld [vmem:[%s1316 + $0x18] sm:$0xff]
  %v1321 = vld [vmem:[%s1316 + $0x20] sm:$0xff]
  %v1322 = vld [vmem:[%s1316 + $0x28] sm:$0xff]
  %v1323 = vld [vmem:[%s1316 + $0x30] sm:$0xff]
  %v1324 = vld [vmem:[%s1316 + $0x38] sm:$0xff]
  %v1325 = vmax.f32 %v1308, %v1317
  %v1326 = vmax.f32 %v1309, %v1318
  %v1327 = vmax.f32 %v1310, %v1319
  %v1328 = vmax.f32 %v1311, %v1320
  %v1329 = vmax.f32 %v1312, %v1321
  %v1330 = vmax.f32 %v1313, %v1322
  %v1331 = vmax.f32 %v1314, %v1323
  %v1332 = vmax.f32 %v1315, %v1324
  %s1333 = scalar_lea.vmem [#allocation2], 1024
  %v1334 = vld [vmem:[%s1333] sm:$0xff]
  %v1335 = vld [vmem:[%s1333 + $0x8] sm:$0xff]
  %v1336 = vld [vmem:[%s1333 + $0x10] sm:$0xff]
  %v1337 = vld [vmem:[%s1333 + $0x18] sm:$0xff]
  %v1338 = vld [vmem:[%s1333 + $0x20] sm:$0xff]
  %v1339 = vld [vmem:[%s1333 + $0x28] sm:$0xff]
  %v1340 = vld [vmem:[%s1333 + $0x30] sm:$0xff]
  %v1341 = vld [vmem:[%s1333 + $0x38] sm:$0xff]
  %v1342 = vmax.f32 %v1325, %v1334
  %v1343 = vmax.f32 %v1326, %v1335
  %v1344 = vmax.f32 %v1327, %v1336
  %v1345 = vmax.f32 %v1328, %v1337
  %v1346 = vmax.f32 %v1329, %v1338
  %v1347 = vmax.f32 %v1330, %v1339
  %v1348 = vmax.f32 %v1331, %v1340
  %v1349 = vmax.f32 %v1332, %v1341
  %s1350 = scalar_lea.vmem %s1, 448
  %1351 = vst.msk [vmem:[%s1350] sm:$0xff] %vm993, %v1342
  %1352 = vst.msk [vmem:[%s1350 + $0x8] sm:$0xff] %vm993, %v1343
  %1353 = vst.msk [vmem:[%s1350 + $0x10] sm:$0xff] %vm993, %v1344
  %1354 = vst.msk [vmem:[%s1350 + $0x18] sm:$0xff] %vm993, %v1345
  %1355 = vst.msk [vmem:[%s1350 + $0x20] sm:$0xff] %vm993, %v1346
  %1356 = vst.msk [vmem:[%s1350 + $0x28] sm:$0xff] %vm993, %v1347
  %1357 = vst.msk [vmem:[%s1350 + $0x30] sm:$0xff] %vm993, %v1348
  %1358 = vst.msk [vmem:[%s1350 + $0x38] sm:$0xff] %vm993, %v1349
  // Predicated region
  $region13: #{deterministic_max_pool3d.1} parent=0 // pred_check
    _
  $region14: #{deterministic_max_pool3d.1} parent=0 // pred_check_branch
    %1360 = sbr.rel (0) target = $region16
  $region15: #{deterministic_max_pool3d.1} parent=0 // pred_region
    _
  $region16: #{deterministic_max_pool3d.1} parent=0 // pred_fallthru
    _
  // Predicated region
  $region17: #{deterministic_max_pool3d.1} parent=0 // pred_check
    _
  $region18: #{deterministic_max_pool3d.1} parent=0 // pred_check_branch
    %1362 = sbr.rel (0) target = $region20
  $region19: #{deterministic_max_pool3d.1} parent=0 // pred_region
    _
  $region20: #{deterministic_max_pool3d.1} parent=0 // pred_fallthru
    _

</llo_original>
